<compile_context>
chip_gen: v7x
topology: tpu7x:2x2x1
jax: 0.10.0
libtpu: 0.0.40
codegen_flags: <defaults>
</compile_context>

<pallas_src>
import jax
import jax.numpy as jnp
import numpy as np
from jax import lax
from jax.experimental import pallas as pl
from jax.experimental.pallas import tpu as pltpu


def _round_up(x, m):
    return ((x + m - 1) // m) * m


def _cdiv(a, b):
    return -(-a // b)


def _make_dag_kernel(K, tk, kt, n_contract, xw_resident):
    """Kernel body for fixed (static) tiling parameters."""
    mask_tail = (n_contract % tk) != 0  # last contraction block over-reads HBM

    def kernel(h_ref, gso_ref, xw_ref, b_ref, o_ref, acc_ref):
        k = pl.program_id(1)

        @pl.when(k == 0)
        def _init():
            acc_ref[...] = jnp.zeros_like(acc_ref)

        # Fold the filter taps: g = sum_k h[k] * G_k (VPU work, hidden under
        # the HBM-bound GSO stream).
        g = h_ref[0] * gso_ref[0]
        for kk in range(1, K):
            g = g + h_ref[kk] * gso_ref[kk]

        if mask_tail:
            # Zero the out-of-range contraction columns of the tail block
            # (their contents are unspecified when tk does not divide N).
            col = k * tk + lax.broadcasted_iota(jnp.int32, g.shape, 1)
            g = jnp.where(col < n_contract, g, 0.0)

        if xw_resident and kt > 1:
            off = pl.multiple_of(k * tk, tk)
            xw = xw_ref[pl.ds(off, tk), :]
        else:
            xw = xw_ref[...]

        acc_ref[...] += jnp.dot(g, xw, preferred_element_type=jnp.float32)

        @pl.when(k == pl.num_programs(1) - 1)
        def _finalize():
            o_ref[...] = (acc_ref[...] + b_ref[...]).astype(o_ref.dtype)

    return kernel


def _dag_conv_core(GSOs, XW, h, bias, out_dtype, *, row_tile=256, col_tile=512):
    """out = (sum_k h[k] * GSOs[k]) @ XW [+ bias]   -> (N, D) in out_dtype."""
    K, N, _ = GSOs.shape
    D = XW.shape[1]
    out_p = _round_up(D, 128)                       # lane-dense output columns
    out_isz = jnp.dtype(out_dtype).itemsize

    # ---- per-generation VMEM budget ---------------------------------------
    try:
        vmem_phys = int(pltpu.get_tpu_info().vmem_capacity_bytes)
    except Exception:
        vmem_phys = 64 * 1024 * 1024                # v7x per-TC VMEM (worst case)
    budget = int(vmem_phys * 0.75)

    # ---- contraction tile (multiple of 128, or the full dim for small N) ---
    if N % 128 == 0:
        tk = 128
        for cand in range(min(col_tile, N), 127, -128):
            if N % cand == 0:                       # tk dividing N: no tail mask
                tk = cand
                break
    elif N <= col_tile:
        tk = N                                      # single full-dim block
    else:
        tk = col_tile                               # tail block masked in-kernel

    # ---- row tile (multiple of 8); >=2 tiles so the leading "parallel" axis
    # ---- can split across v7x's two TensorCores ----------------------------
    if N >= 16:
        tm = min(row_tile, _round_up((N + 1) // 2, 8))
    elif N >= 8:
        tm = 8
    else:
        tm = N

    def working_set(tm_, tk_, resident):
        kt_ = _cdiv(N, tk_)
        xw_b = kt_ * tk_ * out_p * 4 if resident else 2 * tk_ * out_p * 4
        return (2 * K * tm_ * tk_ * 4               # GSO blocks, double-buffered
                + xw_b                              # RHS (XW)
                + out_p * 4                         # bias
                + tm_ * out_p * 4                   # f32 accumulator scratch
                + 2 * tm_ * out_p * out_isz)        # output blocks

    xw_resident = True
    while working_set(tm, tk, xw_resident) > budget and tk % 256 == 0:
        tk //= 2
    while working_set(tm, tk, xw_resident) > budget and tm >= 16 and tm % 8 == 0:
        tm = max(8, ((tm // 2) // 8) * 8)
    if working_set(tm, tk, xw_resident) > budget:
        # Resident XW itself does not fit: stream (tk, out_p) RHS blocks.
        xw_resident = False

    kt = _cdiv(N, tk)
    grid_m = _cdiv(N, tm)
    est = working_set(tm, tk, xw_resident)
    vmem_limit = int(min(max(2 * est, 64 << 20, est + (8 << 20)),
                         0.92 * vmem_phys))

    # ---- zero-pad the (small) RHS / bias; GSOs are streamed unpadded -------
    rows_p = kt * tk
    XW_p = XW.astype(jnp.float32)
    if rows_p != N or out_p != D:
        XW_p = jnp.pad(XW_p, ((0, rows_p - N), (0, out_p - D)))
    if bias is None:
        b2d = jnp.zeros((1, out_p), jnp.float32)
    else:
        b2d = jnp.pad(bias.astype(jnp.float32).reshape(1, D),
                      ((0, 0), (0, out_p - D)))
    h32 = h.astype(jnp.float32)

    kernel = _make_dag_kernel(K, tk, kt, N, xw_resident)

    def build(single_buffer):
        xw_kw, b_kw = {}, {}
        if single_buffer:
            b_kw = dict(pipeline_mode=pl.Buffered(1))
            if xw_resident:
                xw_kw = dict(pipeline_mode=pl.Buffered(1))
        if xw_resident:
            xw_spec = pl.BlockSpec((rows_p, out_p), lambda i, k: (0, 0), **xw_kw)
        else:
            xw_spec = pl.BlockSpec((tk, out_p), lambda i, k: (k, 0))
        grid_spec = pltpu.PrefetchScalarGridSpec(
            num_scalar_prefetch=0,
            grid=(grid_m, kt),
            in_specs=[
                pl.BlockSpec(memory_space=pltpu.MemorySpace.SMEM),        # h
                pl.BlockSpec((K, tm, tk), lambda i, k: (0, i, k)),        # GSOs
                xw_spec,                                                  # XW
                pl.BlockSpec((1, out_p), lambda i, k: (0, 0), **b_kw),    # bias
            ],
            out_specs=pl.BlockSpec((tm, out_p), lambda i, k: (i, 0)),
            scratch_shapes=[pltpu.VMEM((tm, out_p), jnp.float32)],
        )
        return pl.pallas_call(
            kernel,
            out_shape=jax.ShapeDtypeStruct((N, out_p), out_dtype),
            grid_spec=grid_spec,
            compiler_params=pltpu.CompilerParams(
                dimension_semantics=("parallel", "arbitrary"),
                vmem_limit_bytes=vmem_limit,
            ),
        )

    try:
        out = build(single_buffer=True)(h32, GSOs, XW_p, b2d)
    except Exception:
        # pipeline_mode=pl.Buffered(1) not supported on this jax version:
        # fall back to default double buffering (costs VMEM, not correctness).
        out = build(single_buffer=False)(h32, GSOs, XW_p, b2d)

    if out_p != D:
        out = out[:, :D]
    return out


def dag_conv_layer(X, GSOs, h, W, b=None, *, row_tile=256, col_tile=512):
    """Forward pass of DAGConvLayer.

    X: (N, in_dim) or (B, N, in_dim);  GSOs: (K, N, N);  h: (K,)
    W: (in_dim, out_dim);  b: (out_dim,) or None.
    """
    out_dtype = X.dtype
    Wf = W.astype(jnp.float32)
    if X.ndim == 3:
        B, N, _ = X.shape
        out_dim = W.shape[1]
        XW = jnp.matmul(X.astype(jnp.float32), Wf)             # (B, N, out_dim)
        # Fold the batch into the output-feature axis: out[b] = G_eff @ XW[b].
        XW2 = jnp.transpose(XW, (1, 0, 2)).reshape(N, B * out_dim)
        b2 = None if b is None else jnp.tile(b.astype(jnp.float32), B)
        out2 = _dag_conv_core(GSOs, XW2, h, b2, out_dtype,
                              row_tile=row_tile, col_tile=col_tile)
        return jnp.transpose(out2.reshape(N, B, out_dim), (1, 0, 2))
    XW = jnp.matmul(X.astype(jnp.float32), Wf)                  # (N, out_dim)
    return _dag_conv_core(GSOs, XW, h, b, out_dtype,
                          row_tile=row_tile, col_tile=col_tile)


def _xavier_uniform(key, shape, dtype=jnp.float32):
    """Matches torch.nn.init.xavier_uniform_ (gain=1) for a 2-D weight."""
    fan_in, fan_out = shape
    limit = float(np.sqrt(6.0 / (fan_in + fan_out)))
    return jax.random.uniform(key, shape, dtype, minval=-limit, maxval=limit)


if __name__ == "__main__":
    key = jax.random.PRNGKey(0)
    k1, k2, k3, k4, k5, k6 = jax.random.split(key, 6)

    # ------------------------------ 2-D branch ------------------------------
    N, in_dim, out_dim, K = 128, 32, 64, 3
    h = jnp.sqrt(jnp.ones((K,), jnp.float32) / K)        # module init of h
    W = _xavier_uniform(k1, (in_dim, out_dim))            # xavier_uniform_
    b = jnp.zeros((out_dim,), jnp.float32)                # constant_(0.0)
    X = jax.random.normal(k2, (N, in_dim), jnp.float32)
    GSOs = jax.random.normal(k3, (K, N, N), jnp.float32)
    GSOs = GSOs * jnp.triu(jnp.ones((N, N), jnp.float32), k=1)[None]

    out = jax.block_until_ready(dag_conv_layer(X, GSOs, h, W, b))
    ref = jnp.sum((h[:, None, None] * GSOs) @ (X @ W), axis=0) + b[None, :]
    np.testing.assert_allclose(np.asarray(out), np.asarray(ref),
                               rtol=1e-4, atol=1e-3)

    # -------------------------- 3-D (batched X) branch ----------------------
    Bsz, N3, in3, out3, K3 = 2, 64, 16, 24, 2
    h3 = jnp.sqrt(jnp.ones((K3,), jnp.float32) / K3)
    W3 = _xavier_uniform(k4, (in3, out3))
    b3 = 0.1 * jax.random.normal(k5, (out3,), jnp.float32)   # exercise bias add
    X3 = jax.random.normal(k6, (Bsz, N3, in3), jnp.float32)
    G3 = jax.random.normal(k3, (K3, N3, N3), jnp.float32)
    G3 = G3 * jnp.triu(jnp.ones((N3, N3), jnp.float32), k=1)[None]

    out3d = jax.block_until_ready(dag_conv_layer(X3, G3, h3, W3, b3))
    XW3 = jnp.matmul(X3, W3)
    ref3 = jnp.einsum("knm,bmo->bno", h3[:, None, None] * G3, XW3) + b3
    np.testing.assert_allclose(np.asarray(out3d), np.asarray(ref3),
                               rtol=1e-4, atol=1e-3)

    print("KERNEL_OK")
</pallas_src>

<mosaic_0001>
module attributes {stable_mosaic.version = 11 : i64} {
  func.func @kernel(%arg0: i32, %arg1: i32, %arg2: memref<3xf32, #tpu.memory_space<smem>>, %arg3: memref<3x64x128xf32, #tpu.memory_space<vmem>>, %arg4: memref<128x128xf32, #tpu.memory_space<vmem>>, %arg5: memref<1x128xf32, #tpu.memory_space<vmem>>, %arg6: memref<64x128xf32, #tpu.memory_space<vmem>>, %arg7: memref<64x128xf32, #tpu.memory_space<vmem>>) attributes {dimension_semantics = [#tpu.dimension_semantics<parallel>, #tpu.dimension_semantics<arbitrary>], iteration_bounds = array<i64: 2, 1>, scalar_prefetch = 0 : i64, scratch_operands = 1 : i64, tpu.core_type = #tpu.core_type<tc>, window_params = [{transform_indices = @transform_0, window_bounds = array<i64: 3>}, {transform_indices = @transform_1, window_bounds = array<i64: 3, 64, 128>}, {pipeline_mode = #tpu.pipeline_mode<synchronous>, transform_indices = @transform_2, window_bounds = array<i64: 128, 128>}, {pipeline_mode = #tpu.pipeline_mode<synchronous>, transform_indices = @transform_3, window_bounds = array<i64: 1, 128>}, {transform_indices = @transform_4, window_bounds = array<i64: 64, 128>}]} {
    %c0_i32 = arith.constant 0 : i32
    %0 = arith.cmpi eq, %arg1, %c0_i32 : i32
    %1 = arith.extui %0 : i1 to i32
    %c0_i32_0 = arith.constant 0 : i32
    %2 = arith.cmpi ne, %1, %c0_i32_0 : i32
    scf.if %2 {
      %cst_18 = arith.constant 0.000000e+00 : f32
      %28 = vector.broadcast %cst_18 : f32 to vector<64x128xf32>
      %c0_19 = arith.constant 0 : index
      %c0_20 = arith.constant 0 : index
      %29 = vector.load %arg7[%c0_19, %c0_20] : memref<64x128xf32, #tpu.memory_space<vmem>>, vector<64x128xf32>
      tpu.vector_store %arg7[%c0_19, %c0_20], %28 {strides = array<i32>} : memref<64x128xf32, #tpu.memory_space<vmem>>, vector<64x128xf32>,
    } else {
    }
    %c0 = arith.constant 0 : index
    %3 = memref.load %arg2[%c0] : memref<3xf32, #tpu.memory_space<smem>>
    %c0_1 = arith.constant 0 : index
    %c0_2 = arith.constant 0 : index
    %c0_3 = arith.constant 0 : index
    %4 = vector.load %arg3[%c0_1, %c0_2, %c0_3] : memref<3x64x128xf32, #tpu.memory_space<vmem>>, vector<1x64x128xf32>
    %5 = vector.shape_cast %4 : vector<1x64x128xf32> to vector<64x128xf32>
    %6 = vector.broadcast %3 : f32 to vector<64x128xf32>
    %7 = arith.mulf %6, %5 : vector<64x128xf32>
    %c1 = arith.constant 1 : index
    %8 = memref.load %arg2[%c1] : memref<3xf32, #tpu.memory_space<smem>>
    %c1_4 = arith.constant 1 : index
    %c0_5 = arith.constant 0 : index
    %c0_6 = arith.constant 0 : index
    %9 = vector.load %arg3[%c1_4, %c0_5, %c0_6] : memref<3x64x128xf32, #tpu.memory_space<vmem>>, vector<1x64x128xf32>
    %10 = vector.shape_cast %9 : vector<1x64x128xf32> to vector<64x128xf32>
    %11 = vector.broadcast %8 : f32 to vector<64x128xf32>
    %12 = arith.mulf %11, %10 : vector<64x128xf32>
    %13 = arith.addf %7, %12 : vector<64x128xf32>
    %c2 = arith.constant 2 : index
    %14 = memref.load %arg2[%c2] : memref<3xf32, #tpu.memory_space<smem>>
    %c2_7 = arith.constant 2 : index
    %c0_8 = arith.constant 0 : index
    %c0_9 = arith.constant 0 : index
    %15 = vector.load %arg3[%c2_7, %c0_8, %c0_9] : memref<3x64x128xf32, #tpu.memory_space<vmem>>, vector<1x64x128xf32>
    %16 = vector.shape_cast %15 : vector<1x64x128xf32> to vector<64x128xf32>
    %17 = vector.broadcast %14 : f32 to vector<64x128xf32>
    %18 = arith.mulf %17, %16 : vector<64x128xf32>
    %19 = arith.addf %13, %18 : vector<64x128xf32>
    %c0_10 = arith.constant 0 : index
    %c0_11 = arith.constant 0 : index
    %20 = vector.load %arg4[%c0_10, %c0_11] : memref<128x128xf32, #tpu.memory_space<vmem>>, vector<128x128xf32>
    %c0_12 = arith.constant 0 : index
    %c0_13 = arith.constant 0 : index
    %21 = vector.load %arg7[%c0_12, %c0_13] : memref<64x128xf32, #tpu.memory_space<vmem>>, vector<64x128xf32>
    %cst = arith.constant dense<0.000000e+00> : vector<64x128xf32>
    %22 = tpu.matmul %19, %20, %cst {dimension_numbers = #tpu.dot_dimension_numbers<[1], [0], [0], [1], [0, 0, 1, 1], [], []>} : vector<64x128xf32>, vector<128x128xf32>, vector<64x128xf32> -> vector<64x128xf32>
    %23 = arith.addf %21, %22 : vector<64x128xf32>
    %c0_14 = arith.constant 0 : index
    %c0_15 = arith.constant 0 : index
    %24 = vector.load %arg7[%c0_14, %c0_15] : memref<64x128xf32, #tpu.memory_space<vmem>>, vector<64x128xf32>
    tpu.vector_store %arg7[%c0_14, %c0_15], %23 {strides = array<i32>} : memref<64x128xf32, #tpu.memory_space<vmem>>, vector<64x128xf32>,
    %c0_i32_16 = arith.constant 0 : i32
    %25 = arith.cmpi eq, %arg1, %c0_i32_16 : i32
    %26 = arith.extui %25 : i1 to i32
    %c0_i32_17 = arith.constant 0 : i32
    %27 = arith.cmpi ne, %26, %c0_i32_17 : i32
    scf.if %27 {
      %c0_18 = arith.constant 0 : index
      %c0_19 = arith.constant 0 : index
      %28 = vector.load %arg7[%c0_18, %c0_19] : memref<64x128xf32, #tpu.memory_space<vmem>>, vector<64x128xf32>
      %c0_20 = arith.constant 0 : index
      %c0_21 = arith.constant 0 : index
      %29 = vector.load %arg5[%c0_20, %c0_21] : memref<1x128xf32, #tpu.memory_space<vmem>>, vector<1x128xf32>
      %30 = vector.broadcast %29 : vector<1x128xf32> to vector<64x128xf32>
      %31 = arith.addf %28, %30 : vector<64x128xf32>
      %c0_22 = arith.constant 0 : index
      %c0_23 = arith.constant 0 : index
      %32 = vector.load %arg6[%c0_22, %c0_23] : memref<64x128xf32, #tpu.memory_space<vmem>>, vector<64x128xf32>
      tpu.vector_store %arg6[%c0_22, %c0_23], %31 {strides = array<i32>} : memref<64x128xf32, #tpu.memory_space<vmem>>, vector<64x128xf32>,
    } else {
    }
    return
  }
  func.func @transform_0(%arg0: i32, %arg1: i32) -> i32 {
    %c0_i32 = arith.constant 0 : i32
    %c0_i32_0 = arith.constant 0 : i32
    return %c0_i32 : i32
  }
  func.func @transform_1(%arg0: i32, %arg1: i32) -> (i32, i32, i32) {
    %c0_i32 = arith.constant 0 : i32
    %c0_i32_0 = arith.constant 0 : i32
    return %c0_i32, %arg0, %arg1 : i32, i32, i32
  }
  func.func @transform_2(%arg0: i32, %arg1: i32) -> (i32, i32) {
    %c0_i32 = arith.constant 0 : i32
    %c0_i32_0 = arith.constant 0 : i32
    %c0_i32_1 = arith.constant 0 : i32
    return %c0_i32, %c0_i32_0 : i32, i32
  }
  func.func @transform_3(%arg0: i32, %arg1: i32) -> (i32, i32) {
    %c0_i32 = arith.constant 0 : i32
    %c0_i32_0 = arith.constant 0 : i32
    %c0_i32_1 = arith.constant 0 : i32
    return %c0_i32, %c0_i32_0 : i32, i32
  }
  func.func @transform_4(%arg0: i32, %arg1: i32) -> (i32, i32) {
    %c0_i32 = arith.constant 0 : i32
    %c0_i32_0 = arith.constant 0 : i32
    return %arg0, %c0_i32 : i32, i32
  }
}

module attributes {stable_mosaic.version = 11 : i64} {
  func.func @kernel(%arg0: i32, %arg1: i32, %arg2: memref<3xf32, #tpu.memory_space<smem>>, %arg3: memref<3x64x128xf32, #tpu.memory_space<vmem>>, %arg4: memref<128x128xf32, #tpu.memory_space<vmem>>, %arg5: memref<1x128xf32, #tpu.memory_space<vmem>>, %arg6: memref<64x128xf32, #tpu.memory_space<vmem>>, %arg7: memref<64x128xf32, #tpu.memory_space<vmem>>) attributes {dimension_semantics = [#tpu.dimension_semantics<parallel>, #tpu.dimension_semantics<arbitrary>], iteration_bounds = array<i64: 2, 1>, scalar_prefetch = 0 : i64, scratch_operands = 1 : i64, tpu.core_type = #tpu.core_type<tc>, window_params = [{transform_indices = @transform_0, window_bounds = array<i64: 3>}, {transform_indices = @transform_1, window_bounds = array<i64: 3, 64, 128>}, {pipeline_mode = #tpu.pipeline_mode<synchronous>, transform_indices = @transform_2, window_bounds = array<i64: 128, 128>}, {pipeline_mode = #tpu.pipeline_mode<synchronous>, transform_indices = @transform_3, window_bounds = array<i64: 1, 128>}, {transform_indices = @transform_4, window_bounds = array<i64: 64, 128>}]} {
    %c0_i32 = arith.constant 0 : i32
    %0 = arith.cmpi eq, %arg1, %c0_i32 : i32
    %1 = arith.extui %0 : i1 to i32
    %c0_i32_0 = arith.constant 0 : i32
    %2 = arith.cmpi ne, %1, %c0_i32_0 : i32
    scf.if %2 {
      %cst_18 = arith.constant 0.000000e+00 : f32
      %28 = vector.broadcast %cst_18 : f32 to vector<64x128xf32>
      %c0_19 = arith.constant 0 : index
      %c0_20 = arith.constant 0 : index
      %29 = vector.load %arg7[%c0_19, %c0_20] : memref<64x128xf32, #tpu.memory_space<vmem>>, vector<64x128xf32>
      tpu.vector_store %arg7[%c0_19, %c0_20], %28 {strides = array<i32>} : memref<64x128xf32, #tpu.memory_space<vmem>>, vector<64x128xf32>,
    } else {
    }
    %c0 = arith.constant 0 : index
    %3 = memref.load %arg2[%c0] : memref<3xf32, #tpu.memory_space<smem>>
    %c0_1 = arith.constant 0 : index
    %c0_2 = arith.constant 0 : index
    %c0_3 = arith.constant 0 : index
    %4 = vector.load %arg3[%c0_1, %c0_2, %c0_3] : memref<3x64x128xf32, #tpu.memory_space<vmem>>, vector<1x64x128xf32>
    %5 = vector.shape_cast %4 : vector<1x64x128xf32> to vector<64x128xf32>
    %6 = vector.broadcast %3 : f32 to vector<64x128xf32>
    %7 = arith.mulf %6, %5 : vector<64x128xf32>
    %c1 = arith.constant 1 : index
    %8 = memref.load %arg2[%c1] : memref<3xf32, #tpu.memory_space<smem>>
    %c1_4 = arith.constant 1 : index
    %c0_5 = arith.constant 0 : index
    %c0_6 = arith.constant 0 : index
    %9 = vector.load %arg3[%c1_4, %c0_5, %c0_6] : memref<3x64x128xf32, #tpu.memory_space<vmem>>, vector<1x64x128xf32>
    %10 = vector.shape_cast %9 : vector<1x64x128xf32> to vector<64x128xf32>
    %11 = vector.broadcast %8 : f32 to vector<64x128xf32>
    %12 = arith.mulf %11, %10 : vector<64x128xf32>
    %13 = arith.addf %7, %12 : vector<64x128xf32>
    %c2 = arith.constant 2 : index
    %14 = memref.load %arg2[%c2] : memref<3xf32, #tpu.memory_space<smem>>
    %c2_7 = arith.constant 2 : index
    %c0_8 = arith.constant 0 : index
    %c0_9 = arith.constant 0 : index
    %15 = vector.load %arg3[%c2_7, %c0_8, %c0_9] : memref<3x64x128xf32, #tpu.memory_space<vmem>>, vector<1x64x128xf32>
    %16 = vector.shape_cast %15 : vector<1x64x128xf32> to vector<64x128xf32>
    %17 = vector.broadcast %14 : f32 to vector<64x128xf32>
    %18 = arith.mulf %17, %16 : vector<64x128xf32>
    %19 = arith.addf %13, %18 : vector<64x128xf32>
    %c0_10 = arith.constant 0 : index
    %c0_11 = arith.constant 0 : index
    %20 = vector.load %arg4[%c0_10, %c0_11] : memref<128x128xf32, #tpu.memory_space<vmem>>, vector<128x128xf32>
    %c0_12 = arith.constant 0 : index
    %c0_13 = arith.constant 0 : index
    %21 = vector.load %arg7[%c0_12, %c0_13] : memref<64x128xf32, #tpu.memory_space<vmem>>, vector<64x128xf32>
    %cst = arith.constant dense<0.000000e+00> : vector<64x128xf32>
    %22 = tpu.matmul %19, %20, %cst {dimension_numbers = #tpu.dot_dimension_numbers<[1], [0], [0], [1], [0, 0, 1, 1], [], []>} : vector<64x128xf32>, vector<128x128xf32>, vector<64x128xf32> -> vector<64x128xf32>
    %23 = arith.addf %21, %22 : vector<64x128xf32>
    %c0_14 = arith.constant 0 : index
    %c0_15 = arith.constant 0 : index
    %24 = vector.load %arg7[%c0_14, %c0_15] : memref<64x128xf32, #tpu.memory_space<vmem>>, vector<64x128xf32>
    tpu.vector_store %arg7[%c0_14, %c0_15], %23 {strides = array<i32>} : memref<64x128xf32, #tpu.memory_space<vmem>>, vector<64x128xf32>,
    %c0_i32_16 = arith.constant 0 : i32
    %25 = arith.cmpi eq, %arg1, %c0_i32_16 : i32
    %26 = arith.extui %25 : i1 to i32
    %c0_i32_17 = arith.constant 0 : i32
    %27 = arith.cmpi ne, %26, %c0_i32_17 : i32
    scf.if %27 {
      %c0_18 = arith.constant 0 : index
      %c0_19 = arith.constant 0 : index
      %28 = vector.load %arg7[%c0_18, %c0_19] : memref<64x128xf32, #tpu.memory_space<vmem>>, vector<64x128xf32>
      %c0_20 = arith.constant 0 : index
      %c0_21 = arith.constant 0 : index
      %29 = vector.load %arg5[%c0_20, %c0_21] : memref<1x128xf32, #tpu.memory_space<vmem>>, vector<1x128xf32>
      %30 = vector.broadcast %29 : vector<1x128xf32> to vector<64x128xf32>
      %31 = arith.addf %28, %30 : vector<64x128xf32>
      %c0_22 = arith.constant 0 : index
      %c0_23 = arith.constant 0 : index
      %32 = vector.load %arg6[%c0_22, %c0_23] : memref<64x128xf32, #tpu.memory_space<vmem>>, vector<64x128xf32>
      tpu.vector_store %arg6[%c0_22, %c0_23], %31 {strides = array<i32>} : memref<64x128xf32, #tpu.memory_space<vmem>>, vector<64x128xf32>,
    } else {
    }
    return
  }
  func.func @transform_0(%arg0: i32, %arg1: i32) -> i32 {
    %c0_i32 = arith.constant 0 : i32
    %c0_i32_0 = arith.constant 0 : i32
    return %c0_i32 : i32
  }
  func.func @transform_1(%arg0: i32, %arg1: i32) -> (i32, i32, i32) {
    %c0_i32 = arith.constant 0 : i32
    %c0_i32_0 = arith.constant 0 : i32
    return %c0_i32, %arg0, %arg1 : i32, i32, i32
  }
  func.func @transform_2(%arg0: i32, %arg1: i32) -> (i32, i32) {
    %c0_i32 = arith.constant 0 : i32
    %c0_i32_0 = arith.constant 0 : i32
    %c0_i32_1 = arith.constant 0 : i32
    return %c0_i32, %c0_i32_0 : i32, i32
  }
  func.func @transform_3(%arg0: i32, %arg1: i32) -> (i32, i32) {
    %c0_i32 = arith.constant 0 : i32
    %c0_i32_0 = arith.constant 0 : i32
    %c0_i32_1 = arith.constant 0 : i32
    return %c0_i32, %c0_i32_0 : i32, i32
  }
  func.func @transform_4(%arg0: i32, %arg1: i32) -> (i32, i32) {
    %c0_i32 = arith.constant 0 : i32
    %c0_i32_0 = arith.constant 0 : i32
    return %arg0, %c0_i32 : i32, i32
  }
}

</mosaic_0001>

<llo_original>
// kernel: tpu_custom_call.1
$region0: #{tpu_custom_call.1}
  #allocation0 [shape = 'u32[]', space=smem, size = 0x4, offset = 0x4, fixed_abs, tag = 'smem constant byte address 0x4 - core index']
  #allocation1 [shape = 'u32[144,128]{1,0:T(1,128)}', space=vmem, size = 0x12000, scoped, tag = 'internal scratch']
  #allocation2 [shape = 'f32[64,128]{1,0:T(8,128)}', space=vmem, size = 0x8000, scoped, tag = 'scratch operand']
  #allocation11 [shape = 's32[]', space=sflag, size = 0x4, offset = 0, fixed_abs, tag = 'sflag constant byte address 0x0 - dummy sync flag']
  %s0 = inlined_call_operand.hbm [shape: f32[3], index: 0, kind: input, shape index: {}]
  %s1 = inlined_call_operand.hbm [shape: f32[3,128,128], index: 1, kind: input, shape index: {}]
  %s2 = inlined_call_operand.hbm [shape: f32[128,128], index: 2, kind: input, shape index: {}]
  %s3 = inlined_call_operand.vmem [shape: f32[1,128], index: 3, kind: input, shape index: {}]
  %s4 = inlined_call_operand.hbm [shape: f32[128,128], index: 4, kind: output, shape index: {}]
  %s5 = sld [smem:[#allocation0]]
  $region69: #{tpu_custom_call.1} parent=0
    _
  %s7 = ssub.s32 1, %s5
  %s8 = scalar_select 0, %s7, %s5
  $region1: #{tpu_custom_call.1} parent=0
    #allocation3 [shape = 'u8[512]{0}', space=smem, size = 0x200, scoped, tag = 'input window, operand 0, single buffered']
    #allocation4 [shape = 's32[2]{0}', space=sflag, size = 0x8, scoped, tag = 'scoped memory for tpu_custom_call.1']
    #allocation5 [shape = 's32[2]{0}', space=sflag, size = 0x8, scoped, tag = 'scoped memory for tpu_custom_call.1']
    #allocation6 [shape = 's32[2]{0}', space=sflag, size = 0x8, scoped, tag = 'scoped memory for tpu_custom_call.1']
    #allocation7 [shape = 'u8[196608]{0}', space=vmem, size = 0x30000, scoped, tag = 'input window, operand 1']
    #allocation8 [shape = 'u8[65536]{0}', space=vmem, size = 0x10000, scoped, tag = 'input window, operand 2, single buffered']
    #allocation9 [shape = 's32[1]{0}', space=sflag, size = 0x4, scoped, tag = 'scoped memory for tpu_custom_call.1']
    #allocation10 [shape = 'u8[65536]{0}', space=vmem, size = 0x10000, scoped, tag = 'output window, operand 0']
    %9 = vsyncpa [#allocation6], 0
    %10 = vsyncpa [#allocation4], 0
    %s11 = scalar_lea.sflag [#allocation4], 1
    %12 = vsyncpa %s11, 0
    %13 = vsyncpa [#allocation9], 0
    %14 = vsyncpa [#allocation5], 0
    %s15 = scalar_lea.sflag [#allocation5], 1
    %16 = vsyncpa %s15, 0
    loop: start=0, step=1, limit=4
    $region2: #{tpu_custom_call.1} parent=1 // loop_pre_header
      _
    $region3: #{tpu_custom_call.1} parent=1 // loop_header
      %s18 = sphi 0, %s22
      %p19 = scmp.ge.s32.totalorder %s18, 4
      %s25 = sphi 0, %s37
      %s26 = sphi 0, %s33
      %s27 = sphi 0, %s25
      %s28 = sphi 0, %s26
      %s29 = sphi 0, %s27
      %s30 = sphi 0, %s28
      %s38 = sphi 0, %s38
      %s40 = sphi 0, %s38
      %s41 = sphi 0, %s40
      %s55 = sphi 0, %s41
      %s63 = sphi 0, %s65
      %s66 = sphi 0, %s63
      %s67 = sphi 0, %s66
      %s83 = sphi 0, %s67
      %s87 = sphi 0, %s87
      %s89 = sphi 0, %s87
      %s90 = sphi 0, %s89
      %s104 = sphi 0, %s90
      %s108 = sphi 0, %s108
      %s110 = sphi 0, %s108
      %s111 = sphi 0, %s110
      %s125 = sphi 0, %s111
      %s131 = sphi 0, %s133
      %s134 = sphi 0, %s131
      %s135 = sphi 0, %s134
      %s151 = sphi 0, %s135
    $region4: #{tpu_custom_call.1} parent=1 // loop_header_branch
      %21 = sbr.rel (%p19) target = $region8
    $region5: #{tpu_custom_call.1} parent=1 // loop_body
      %s23 = ssub.s32 %s18, 1
      %s24 = ssub.s32 %s18, 2
      %s31 = sadd.s32 1, %s26
      %p32 = scmp.ge.s32.totalorder %s31, 1
      %s33 = scalar_select %p32, 0, %s31
      %s34 = sadd.s32 1, %s25
      %s35 = scalar_select %p32, %s34, %s25
      %p36 = scmp.ge.s32.totalorder %s35, 2
      %s37 = scalar_select %p36, 0, %s35
      %s39 = sadd.s32 %s38, 1
      %p42 = scmp.eq.s32.totalorder %s18, 1
      %p43 = scmp.ne.s32.totalorder %s38, %s40
      %p44 = scmp.eq.s32.totalorder %s18, 0
      %p45 = por %p43, %p44
      %p46 = scmp.ne.s32.totalorder %s38, %s40
      %p47 = scmp.eq.s32.totalorder %s23, 1
      %p48 = por %p46, %p47
      %p49 = scmp.ne.s32.totalorder %s40, %s41
      %p50 = scmp.eq.s32.totalorder %s23, 0
      %p51 = por %p49, %p50
      %p52 = scmp.ne.s32.totalorder %s40, %s41
      %p53 = scmp.eq.s32.totalorder %s24, 1
      %p54 = por %p52, %p53
      %p56 = scmp.ne.s32.totalorder %s41, %s55
      %p57 = scmp.eq.s32.totalorder %s24, 0
      %p58 = por %p56, %p57
      %s59 = ssub.s32 %s25, %s37
      %s60 = ssub.s32 %s26, %s33
      %s61 = sor.u32 %s59, %s60
      %p62 = scmp.eq.s32.totalorder %s61, 0
      %s64 = sadd.s32 %s63, 1
      %s65 = scalar_select %p62, %s63, %s64
      %p68 = pneg %p62
      %p69 = scmp.eq.s32.totalorder %s18, 1
      %p70 = por %p68, %p69
      %p71 = scmp.ne.s32.totalorder %s63, %s66
      %p72 = scmp.eq.s32.totalorder %s18, 0
      %p73 = por %p71, %p72
      %p74 = scmp.ne.s32.totalorder %s63, %s66
      %p75 = scmp.eq.s32.totalorder %s23, 1
      %p76 = por %p74, %p75
      %p77 = scmp.ne.s32.totalorder %s66, %s67
      %p78 = scmp.eq.s32.totalorder %s23, 0
      %p79 = por %p77, %p78
      %p80 = scmp.ne.s32.totalorder %s66, %s67
      %p81 = scmp.eq.s32.totalorder %s24, 1
      %p82 = por %p80, %p81
      %p84 = scmp.ne.s32.totalorder %s67, %s83
      %p85 = scmp.eq.s32.totalorder %s24, 0
      %p86 = por %p84, %p85
      %s88 = sadd.s32 %s87, 1
      %p91 = scmp.eq.s32.totalorder %s18, 1
      %p92 = scmp.ne.s32.totalorder %s87, %s89
      %p93 = scmp.eq.s32.totalorder %s18, 0
      %p94 = por %p92, %p93
      %p95 = scmp.ne.s32.totalorder %s87, %s89
      %p96 = scmp.eq.s32.totalorder %s23, 1
      %p97 = por %p95, %p96
      %p98 = scmp.ne.s32.totalorder %s89, %s90
      %p99 = scmp.eq.s32.totalorder %s23, 0
      %p100 = por %p98, %p99
      %p101 = scmp.ne.s32.totalorder %s89, %s90
      %p102 = scmp.eq.s32.totalorder %s24, 1
      %p103 = por %p101, %p102
      %p105 = scmp.ne.s32.totalorder %s90, %s104
      %p106 = scmp.eq.s32.totalorder %s24, 0
      %p107 = por %p105, %p106
      %s109 = sadd.s32 %s108, 1
      %p112 = scmp.eq.s32.totalorder %s18, 1
      %p113 = scmp.ne.s32.totalorder %s108, %s110
      %p114 = scmp.eq.s32.totalorder %s18, 0
      %p115 = por %p113, %p114
      %p116 = scmp.ne.s32.totalorder %s108, %s110
      %p117 = scmp.eq.s32.totalorder %s23, 1
      %p118 = por %p116, %p117
      %p119 = scmp.ne.s32.totalorder %s110, %s111
      %p120 = scmp.eq.s32.totalorder %s23, 0
      %p121 = por %p119, %p120
      %p122 = scmp.ne.s32.totalorder %s110, %s111
      %p123 = scmp.eq.s32.totalorder %s24, 1
      %p124 = por %p122, %p123
      %p126 = scmp.ne.s32.totalorder %s111, %s125
      %p127 = scmp.eq.s32.totalorder %s24, 0
      %p128 = por %p126, %p127
      %s129 = ssub.s32 %s25, %s37
      %p130 = scmp.eq.s32.totalorder %s129, 0
      %s132 = sadd.s32 %s131, 1
      %s133 = scalar_select %p130, %s131, %s132
      %p136 = pneg %p130
      %p137 = scmp.eq.s32.totalorder %s18, 1
      %p138 = por %p136, %p137
      %p139 = scmp.ne.s32.totalorder %s131, %s134
      %p140 = scmp.eq.s32.totalorder %s18, 0
      %p141 = por %p139, %p140
      %p142 = scmp.ne.s32.totalorder %s131, %s134
      %p143 = scmp.eq.s32.totalorder %s23, 1
      %p144 = por %p142, %p143
      %p145 = scmp.ne.s32.totalorder %s134, %s135
      %p146 = scmp.eq.s32.totalorder %s23, 0
      %p147 = por %p145, %p146
      %p148 = scmp.ne.s32.totalorder %s134, %s135
      %p149 = scmp.eq.s32.totalorder %s24, 1
      %p150 = por %p148, %p149
      %p152 = scmp.ne.s32.totalorder %s135, %s151
      %p153 = scmp.eq.s32.totalorder %s24, 0
      %p154 = por %p152, %p153
      %p155 = scmp.le.s32.totalorder 1, %s18
      %p156 = scmp.lt.s32.totalorder %s18, 3
      %p157 = pnand %p155, %p156
      %p158 = pneg %p157
      // Predicated region
      $region9: #{tpu_custom_call.1} parent=5 // pred_check
        _
      $region10: #{tpu_custom_call.1} parent=5 // pred_check_branch
        %160 = sbr.rel (%p157) target = $region12
      $region11: #{tpu_custom_call.1} parent=5 // pred_region
        %s161 = ssub.s32 %s18, 1
        // Predicated region
        $region13: #{tpu_custom_call.1} parent=11 // pred_check
          %p162 = pneg %p51
        $region14: #{tpu_custom_call.1} parent=11 // pred_check_branch
          %164 = sbr.rel (%p162) target = $region16
        $region15: #{tpu_custom_call.1} parent=11 // pred_region
          %s166 = ssub.s32 16, 16
          %167 = vsyncadd [#allocation6], %s166
          %170 = dma.hbm_to_smem %s0, 16, [#allocation3], [#allocation6]
        $region16: #{tpu_custom_call.1} parent=11 // pred_fallthru
          _
        // Predicated region
        $region17: #{tpu_custom_call.1} parent=11 // pred_check
          %p171 = pneg %p100
        $region18: #{tpu_custom_call.1} parent=11 // pred_check_branch
          %173 = sbr.rel (%p171) target = $region20
        $region19: #{tpu_custom_call.1} parent=11 // pred_region
          %s175 = ssub.s32 2048, 2048
          %176 = vsyncadd [#allocation9], %s175
          %s177 = sshll.u32 [#allocation8], 4
          %s178 = int_to_ptr.vmem [resolvable:$true] %s177
          %183 = dma.hbm_to_vmem [thread:$0]  %s2, 2048, %s178, [#allocation9], 128, 128, 8
        $region20: #{tpu_custom_call.1} parent=11 // pred_fallthru
          _
        // Predicated region
        $region21: #{tpu_custom_call.1} parent=11 // pred_check
          %p184 = pneg %p121
        $region22: #{tpu_custom_call.1} parent=11 // pred_check_branch
          %186 = sbr.rel (%p184) target = $region24
        $region23: #{tpu_custom_call.1} parent=11 // pred_region
          _
        $region24: #{tpu_custom_call.1} parent=11 // pred_fallthru
          _
      $region12: #{tpu_custom_call.1} parent=5 // pred_fallthru
        _
      %p187 = scmp.lt.s32.totalorder %s18, 2
      // Predicated region
      $region25: #{tpu_custom_call.1} parent=5 // pred_check
        %p188 = pneg %p187
      $region26: #{tpu_custom_call.1} parent=5 // pred_check_branch
        %190 = sbr.rel (%p188) target = $region28
      $region27: #{tpu_custom_call.1} parent=5 // pred_region
        // Predicated region
        $region29: #{tpu_custom_call.1} parent=27 // pred_check
          %p191 = pneg %p73
        $region30: #{tpu_custom_call.1} parent=27 // pred_check_branch
          %193 = sbr.rel (%p191) target = $region32
        $region31: #{tpu_custom_call.1} parent=27 // pred_region
          #allocation12 [shape = 'u32[6]{0}', space=smem, size = 0x18, scoped, tag = 'DMA stride descriptor']
          %s194 = sand.u32 %s63, 1
          %s195 = scalar_lea.sflag [#allocation4], %s194
          %s196 = sand.u32 %s63, 1
          %s197 = smul.addr %s196, 192
          %s198 = scalar_lea.vmem [#allocation7], %s197
          %s199 = smul.u32 8, %s25
          %s201 = ssub.s32 3072, 3072
          %202 = vsyncadd %s195, %s201
          %s203 = sadd.s32 %s26, %s199
          %s204 = smul.addr %s203, 128
          %s205 = scalar_lea.hbm %s1, %s204
          %s207 = sshll.u32 1, 14
          %s208 = sxor.u32 4294967295, %s207
          %s210 = sld [smem:[#allocation0]]
          %s211 = sadd.s32 2, %s210
          %s213 = sshll.u32 7, 26
          %s214 = sxor.u32 4294967295, %s213
          %s215 = sand.u32 0, %s214
          %s216 = sshll.u32 %s211, 26
          %s217 = sor.u32 %s215, %s216
          %s218 = sshll.u32 %s198, 4
          %s219 = int_to_ptr.vmem [resolvable:$true] %s218
          %225 = sst [smem:[#allocation12]] 2048
          %s226 = scalar_lea.smem [#allocation12], 1
          %227 = sst [smem:[%s226]] 1024
          %s228 = scalar_lea.smem [#allocation12], 2
          %229 = sst [smem:[%s228]] 8
          %s230 = scalar_lea.smem [#allocation12], 3
          %231 = sst [smem:[%s230]] 128
          %s232 = scalar_lea.smem [#allocation12], 4
          %233 = sst [smem:[%s232]] 128
          %s234 = scalar_lea.smem [#allocation12], 5
          %235 = sst [smem:[%s234]] 8
          %237 = dma.general %s205, 3072, %s219, %s195, [#allocation11], [#allocation12], %s217, 0
        $region32: #{tpu_custom_call.1} parent=27 // pred_fallthru
          _
      $region28: #{tpu_custom_call.1} parent=5 // pred_fallthru
        _
      %p238 = scmp.le.s32.totalorder 1, %s18
      %p239 = scmp.lt.s32.totalorder %s18, 3
      %p240 = pnand %p238, %p239
      %p241 = pneg %p240
      // Predicated region
      $region33: #{tpu_custom_call.1} parent=5 // pred_check
        _
      $region34: #{tpu_custom_call.1} parent=5 // pred_check_branch
        %243 = sbr.rel (%p240) target = $region36
      $region35: #{tpu_custom_call.1} parent=5 // pred_region
        %s244 = ssub.s32 %s18, 1
        // Predicated region
        $region37: #{tpu_custom_call.1} parent=35 // pred_check
          %p245 = pneg %p51
        $region38: #{tpu_custom_call.1} parent=35 // pred_check_branch
          %247 = sbr.rel (%p245) target = $region40
        $region39: #{tpu_custom_call.1} parent=35 // pred_region
          %248 = dma.done [#allocation6], 16
        $region40: #{tpu_custom_call.1} parent=35 // pred_fallthru
          _
        %s249 = sand.u32 %s66, 1
        %s250 = scalar_lea.sflag [#allocation4], %s249
        %s251 = sand.u32 %s66, 1
        %s252 = smul.addr %s251, 192
        %s253 = scalar_lea.vmem [#allocation7], %s252
        // Predicated region
        $region41: #{tpu_custom_call.1} parent=35 // pred_check
          %p254 = pneg %p79
        $region42: #{tpu_custom_call.1} parent=35 // pred_check_branch
          %256 = sbr.rel (%p254) target = $region44
        $region43: #{tpu_custom_call.1} parent=35 // pred_region
          %257 = dma.done %s250, 3072
        $region44: #{tpu_custom_call.1} parent=35 // pred_fallthru
          _
        // Predicated region
        $region45: #{tpu_custom_call.1} parent=35 // pred_check
          %p258 = pneg %p100
        $region46: #{tpu_custom_call.1} parent=35 // pred_check_branch
          %260 = sbr.rel (%p258) target = $region48
        $region47: #{tpu_custom_call.1} parent=35 // pred_region
          %261 = dma.done [#allocation9], 2048
        $region48: #{tpu_custom_call.1} parent=35 // pred_fallthru
          _
        %262 = sfence
        %p263 = pneg %p51
        %p264 = pneg %p48
        %s265 = sand.u32 %s66, 1
        %s266 = scalar_lea.sflag [#allocation4], %s265
        %s267 = sand.u32 %s66, 1
        %s268 = smul.addr %s267, 192
        %s269 = scalar_lea.vmem [#allocation7], %s268
        %p270 = pneg %p79
        %p271 = pneg %p76
        %p272 = pneg %p100
        %p273 = pneg %p97
        %p274 = pneg %p121
        %p275 = pneg %p118
        %p276 = pneg %p147
        %p277 = pneg %p144
        %s278 = sand.u32 %s134, 1
        %s279 = scalar_lea.sflag [#allocation5], %s278
        %s280 = sand.u32 %s134, 1
        %s281 = smul.addr %s280, 64
        %s282 = scalar_lea.vmem [#allocation10], %s281
        %s283 = smul.u32 8, %s27
        %s284 = smul.u32 8, %s27
        %p285 = scmp.eq.s32.totalorder %s28, 0
        // Predicated region
        $region49: #{tpu_custom_call.1} parent=35 // pred_check
          %p286 = pneg %p285
        $region50: #{tpu_custom_call.1} parent=35 // pred_check_branch
          %288 = sbr.rel (%p286) target = $region52
        $region51: #{tpu_custom_call.1} parent=35 // pred_region
          %289 = vst [vmem:[#allocation2] sm:$0xff] 0.0
          %290 = vst [vmem:[#allocation2 + $0x8] sm:$0xff] 0.0
          %291 = vst [vmem:[#allocation2 + $0x10] sm:$0xff] 0.0
          %292 = vst [vmem:[#allocation2 + $0x18] sm:$0xff] 0.0
          %293 = vst [vmem:[#allocation2 + $0x20] sm:$0xff] 0.0
          %294 = vst [vmem:[#allocation2 + $0x28] sm:$0xff] 0.0
          %295 = vst [vmem:[#allocation2 + $0x30] sm:$0xff] 0.0
          %296 = vst [vmem:[#allocation2 + $0x38] sm:$0xff] 0.0
        $region52: #{tpu_custom_call.1} parent=35 // pred_fallthru
          _
        %s297 = sld [smem:[#allocation3]]
        %v298 = vld [vmem:[%s253] sm:$0xff]
        %v299 = vld [vmem:[%s253 + $0x8] sm:$0xff]
        %v300 = vld [vmem:[%s253 + $0x10] sm:$0xff]
        %v301 = vld [vmem:[%s253 + $0x18] sm:$0xff]
        %v302 = vld [vmem:[%s253 + $0x20] sm:$0xff]
        %v303 = vld [vmem:[%s253 + $0x28] sm:$0xff]
        %v304 = vld [vmem:[%s253 + $0x30] sm:$0xff]
        %v305 = vld [vmem:[%s253 + $0x38] sm:$0xff]
        %v306 = vstv %s297
        %v307 = vmul.f32 %v306, %v298
        %v308 = vmul.f32 %v306, %v299
        %v309 = vmul.f32 %v306, %v300
        %v310 = vmul.f32 %v306, %v301
        %v311 = vmul.f32 %v306, %v302
        %v312 = vmul.f32 %v306, %v303
        %v313 = vmul.f32 %v306, %v304
        %v314 = vmul.f32 %v306, %v305
        %s315 = sld [smem:[#allocation3 + $0x1]]
        %s316 = scalar_lea.vmem %s253, 64 [#allocation7]
        %v317 = vld [vmem:[%s316] sm:$0xff]
        %v318 = vld [vmem:[%s316 + $0x8] sm:$0xff]
        %v319 = vld [vmem:[%s316 + $0x10] sm:$0xff]
        %v320 = vld [vmem:[%s316 + $0x18] sm:$0xff]
        %v321 = vld [vmem:[%s316 + $0x20] sm:$0xff]
        %v322 = vld [vmem:[%s316 + $0x28] sm:$0xff]
        %v323 = vld [vmem:[%s316 + $0x30] sm:$0xff]
        %v324 = vld [vmem:[%s316 + $0x38] sm:$0xff]
        %v325 = vstv %s315
        %v326 = vmul.f32 %v325, %v317
        %v327 = vmul.f32 %v325, %v318
        %v328 = vmul.f32 %v325, %v319
        %v329 = vmul.f32 %v325, %v320
        %v330 = vmul.f32 %v325, %v321
        %v331 = vmul.f32 %v325, %v322
        %v332 = vmul.f32 %v325, %v323
        %v333 = vmul.f32 %v325, %v324
        %v334 = vadd.f32 %v307, %v326
        %v335 = vadd.f32 %v308, %v327
        %v336 = vadd.f32 %v309, %v328
        %v337 = vadd.f32 %v310, %v329
        %v338 = vadd.f32 %v311, %v330
        %v339 = vadd.f32 %v312, %v331
        %v340 = vadd.f32 %v313, %v332
        %v341 = vadd.f32 %v314, %v333
        %s342 = sld [smem:[#allocation3 + $0x2]]
        %s343 = scalar_lea.vmem %s253, 128 [#allocation7]
        %v344 = vld [vmem:[%s343] sm:$0xff]
        %v345 = vld [vmem:[%s343 + $0x8] sm:$0xff]
        %v346 = vld [vmem:[%s343 + $0x10] sm:$0xff]
        %v347 = vld [vmem:[%s343 + $0x18] sm:$0xff]
        %v348 = vld [vmem:[%s343 + $0x20] sm:$0xff]
        %v349 = vld [vmem:[%s343 + $0x28] sm:$0xff]
        %v350 = vld [vmem:[%s343 + $0x30] sm:$0xff]
        %v351 = vld [vmem:[%s343 + $0x38] sm:$0xff]
        %v352 = vstv %s342
        %v353 = vmul.f32 %v352, %v344
        %v354 = vmul.f32 %v352, %v345
        %v355 = vmul.f32 %v352, %v346
        %v356 = vmul.f32 %v352, %v347
        %v357 = vmul.f32 %v352, %v348
        %v358 = vmul.f32 %v352, %v349
        %v359 = vmul.f32 %v352, %v350
        %v360 = vmul.f32 %v352, %v351
        %v361 = vadd.f32 %v334, %v353
        %v362 = vadd.f32 %v335, %v354
        %v363 = vadd.f32 %v336, %v355
        %v364 = vadd.f32 %v337, %v356
        %v365 = vadd.f32 %v338, %v357
        %v366 = vadd.f32 %v339, %v358
        %v367 = vadd.f32 %v340, %v359
        %v368 = vadd.f32 %v341, %v360
        %v369 = vld [vmem:[#allocation8] sm:$0xff]
        %v370 = vld [vmem:[#allocation8 + $0x8] sm:$0xff]
        %v371 = vld [vmem:[#allocation8 + $0x10] sm:$0xff]
        %v372 = vld [vmem:[#allocation8 + $0x18] sm:$0xff]
        %v373 = vld [vmem:[#allocation8 + $0x20] sm:$0xff]
        %v374 = vld [vmem:[#allocation8 + $0x28] sm:$0xff]
        %v375 = vld [vmem:[#allocation8 + $0x30] sm:$0xff]
        %v376 = vld [vmem:[#allocation8 + $0x38] sm:$0xff]
        %v377 = vld [vmem:[#allocation8 + $0x40] sm:$0xff]
        %v378 = vld [vmem:[#allocation8 + $0x48] sm:$0xff]
        %v379 = vld [vmem:[#allocation8 + $0x50] sm:$0xff]
        %v380 = vld [vmem:[#allocation8 + $0x58] sm:$0xff]
        %v381 = vld [vmem:[#allocation8 + $0x60] sm:$0xff]
        %v382 = vld [vmem:[#allocation8 + $0x68] sm:$0xff]
        %v383 = vld [vmem:[#allocation8 + $0x70] sm:$0xff]
        %v384 = vld [vmem:[#allocation8 + $0x78] sm:$0xff]
        %v385 = vld [vmem:[#allocation2] sm:$0xff]
        %v386 = vld [vmem:[#allocation2 + $0x8] sm:$0xff]
        %v387 = vld [vmem:[#allocation2 + $0x10] sm:$0xff]
        %v388 = vld [vmem:[#allocation2 + $0x18] sm:$0xff]
        %v389 = vld [vmem:[#allocation2 + $0x20] sm:$0xff]
        %v390 = vld [vmem:[#allocation2 + $0x28] sm:$0xff]
        %v391 = vld [vmem:[#allocation2 + $0x30] sm:$0xff]
        %v392 = vld [vmem:[#allocation2 + $0x38] sm:$0xff]
        %393 = vmatprep.subr.mxu0 0.0
        %394 = vmatpush1.msra.mxu0 %v369
        %395 = vmatprep.subr.mxu0 0.0
        %396 = vmatpush1.msra.mxu0 %v370
        %397 = vmatprep.subr.mxu0 0.0
        %398 = vmatpush1.msra.mxu0 %v371
        %399 = vmatprep.subr.mxu0 0.0
        %400 = vmatpush1.msra.mxu0 %v372
        %401 = vmatprep.subr.mxu0 0.0
        %402 = vmatpush1.msra.mxu0 %v373
        %403 = vmatprep.subr.mxu0 0.0
        %404 = vmatpush1.msra.mxu0 %v374
        %405 = vmatprep.subr.mxu0 0.0
        %406 = vmatpush1.msra.mxu0 %v375
        %407 = vmatprep.subr.mxu0 0.0
        %408 = vmatpush1.msra.mxu0 %v376
        %409 = vmatprep.subr.mxu0 0.0
        %410 = vmatpush1.msra.mxu0 %v377
        %411 = vmatprep.subr.mxu0 0.0
        %412 = vmatpush1.msra.mxu0 %v378
        %413 = vmatprep.subr.mxu0 0.0
        %414 = vmatpush1.msra.mxu0 %v379
        %415 = vmatprep.subr.mxu0 0.0
        %416 = vmatpush1.msra.mxu0 %v380
        %417 = vmatprep.subr.mxu0 0.0
        %418 = vmatpush1.msra.mxu0 %v381
        %419 = vmatprep.subr.mxu0 0.0
        %420 = vmatpush1.msra.mxu0 %v382
        %421 = vmatprep.subr.mxu0 0.0
        %422 = vmatpush1.msra.mxu0 %v383
        %423 = vmatprep.subr.mxu0 0.0
        %424 = vmatpush1.msra.mxu0 %v384
        %425 = vmatprep.subr.mxu0 0.0
        %426 = vmatpush1.msra.mxu0 0.0
        %427 = vmatprep.subr.mxu0 0.0
        %428 = vmatpush1.msra.mxu0 0.0
        %429 = vmatprep.subr.mxu0 0.0
        %430 = vmatpush1.msra.mxu0 0.0
        %431 = vmatprep.subr.mxu0 0.0
        %432 = vmatpush1.msra.mxu0 0.0
        %433 = vmatprep.subr.mxu0 0.0
        %434 = vmatpush1.msra.mxu0 0.0
        %435 = vmatprep.subr.mxu0 0.0
        %436 = vmatpush1.msra.mxu0 0.0
        %437 = vmatprep.subr.mxu0 0.0
        %438 = vmatpush1.msra.mxu0 0.0
        %439 = vmatprep.subr.mxu0 0.0
        %440 = vmatpush1.msra.mxu0 0.0
        %441 = vmatprep.subr.mxu0 0.0
        %442 = vmatpush1.msra.mxu0 0.0
        %443 = vmatprep.subr.mxu0 0.0
        %444 = vmatpush1.msra.mxu0 0.0
        %445 = vmatprep.subr.mxu0 0.0
        %446 = vmatpush1.msra.mxu0 0.0
        %447 = vmatprep.subr.mxu0 0.0
        %448 = vmatpush1.msra.mxu0 0.0
        %449 = vmatprep.subr.mxu0 0.0
        %450 = vmatpush1.msra.mxu0 0.0
        %451 = vmatprep.subr.mxu0 0.0
        %452 = vmatpush1.msra.mxu0 0.0
        %453 = vmatprep.subr.mxu0 0.0
        %454 = vmatpush1.msra.mxu0 0.0
        %455 = vmatprep.subr.mxu0 0.0
        %456 = vmatpush1.msra.mxu0 0.0
        %457 = vmatprep.mubr.f32.mxu0 0.0
        %458 = vmatmul.mubr.f32.gmra.mrb[0].mxu0 %v361
        %v459 = vpop.f32.mrb[0].mxu0
        %v460 = vadd.f32 0.0, %v459
        %v461 = vpop.f32.mrb[0].mxu0
        %462 = vmatprep.mubr.f32.mxu0 0.0
        %463 = vmatmul.mubr.f32.gmra.mrb[0].mxu0 %v362
        %v464 = vpop.f32.mrb[0].mxu0
        %v465 = vadd.f32 0.0, %v464
        %v466 = vpop.f32.mrb[0].mxu0
        %467 = vmatprep.mubr.f32.mxu0 0.0
        %468 = vmatmul.mubr.f32.gmra.mrb[0].mxu0 %v363
        %v469 = vpop.f32.mrb[0].mxu0
        %v470 = vadd.f32 0.0, %v469
        %v471 = vpop.f32.mrb[0].mxu0
        %472 = vmatprep.mubr.f32.mxu0 0.0
        %473 = vmatmul.mubr.f32.gmra.mrb[0].mxu0 %v364
        %v474 = vpop.f32.mrb[0].mxu0
        %v475 = vadd.f32 0.0, %v474
        %v476 = vpop.f32.mrb[0].mxu0
        %477 = vmatprep.mubr.f32.mxu0 0.0
        %478 = vmatmul.mubr.f32.gmra.mrb[0].mxu0 %v365
        %v479 = vpop.f32.mrb[0].mxu0
        %v480 = vadd.f32 0.0, %v479
        %v481 = vpop.f32.mrb[0].mxu0
        %482 = vmatprep.mubr.f32.mxu0 0.0
        %483 = vmatmul.mubr.f32.gmra.mrb[0].mxu0 %v366
        %v484 = vpop.f32.mrb[0].mxu0
        %v485 = vadd.f32 0.0, %v484
        %v486 = vpop.f32.mrb[0].mxu0
        %487 = vmatprep.mubr.f32.mxu0 0.0
        %488 = vmatmul.mubr.f32.gmra.mrb[0].mxu0 %v367
        %v489 = vpop.f32.mrb[0].mxu0
        %v490 = vadd.f32 0.0, %v489
        %v491 = vpop.f32.mrb[0].mxu0
        %492 = vmatprep.mubr.f32.mxu0 0.0
        %493 = vmatmul.mubr.f32.gmra.mrb[0].mxu0 %v368
        %v494 = vpop.f32.mrb[0].mxu0
        %v495 = vadd.f32 0.0, %v494
        %v496 = vpop.f32.mrb[0].mxu0
        %497 = vdwg.mxu0
        %v498 = vadd.f32 %v385, %v460
        %v499 = vadd.f32 %v386, %v465
        %v500 = vadd.f32 %v387, %v470
        %v501 = vadd.f32 %v388, %v475
        %v502 = vadd.f32 %v389, %v480
        %v503 = vadd.f32 %v390, %v485
        %v504 = vadd.f32 %v391, %v490
        %v505 = vadd.f32 %v392, %v495
        %506 = vst [vmem:[#allocation2] sm:$0xff] %v498
        %507 = vst [vmem:[#allocation2 + $0x8] sm:$0xff] %v499
        %508 = vst [vmem:[#allocation2 + $0x10] sm:$0xff] %v500
        %509 = vst [vmem:[#allocation2 + $0x18] sm:$0xff] %v501
        %510 = vst [vmem:[#allocation2 + $0x20] sm:$0xff] %v502
        %511 = vst [vmem:[#allocation2 + $0x28] sm:$0xff] %v503
        %512 = vst [vmem:[#allocation2 + $0x30] sm:$0xff] %v504
        %513 = vst [vmem:[#allocation2 + $0x38] sm:$0xff] %v505
        // Predicated region
        $region53: #{tpu_custom_call.1} parent=35 // pred_check
          %p514 = pneg %p285
        $region54: #{tpu_custom_call.1} parent=35 // pred_check_branch
          %516 = sbr.rel (%p514) target = $region56
        $region55: #{tpu_custom_call.1} parent=35 // pred_region
          %v517 = vld [vmem:[#allocation2] sm:$0xff]
          %v518 = vld [vmem:[#allocation2 + $0x8] sm:$0xff]
          %v519 = vld [vmem:[#allocation2 + $0x10] sm:$0xff]
          %v520 = vld [vmem:[#allocation2 + $0x18] sm:$0xff]
          %v521 = vld [vmem:[#allocation2 + $0x20] sm:$0xff]
          %v522 = vld [vmem:[#allocation2 + $0x28] sm:$0xff]
          %v523 = vld [vmem:[#allocation2 + $0x30] sm:$0xff]
          %v524 = vld [vmem:[#allocation2 + $0x38] sm:$0xff]
          %v525 = vld [vmem:[%s3] sm:$0x1]
          %v527 = vlaneseq
          %v528 = vshrl.u32 %v527, 7
          %v529 = vsub.s32 0, %v528
          %v530 = vrot.slane %v525, %v529
          %v532 = vadd.f32 %v517, %v530
          %v533 = vadd.f32 %v518, %v530
          %v534 = vadd.f32 %v519, %v530
          %v535 = vadd.f32 %v520, %v530
          %v536 = vadd.f32 %v521, %v530
          %v537 = vadd.f32 %v522, %v530
          %v538 = vadd.f32 %v523, %v530
          %v539 = vadd.f32 %v524, %v530
          %540 = vst [vmem:[%s282] sm:$0xff] %v532
          %541 = vst [vmem:[%s282 + $0x8] sm:$0xff] %v533
          %542 = vst [vmem:[%s282 + $0x10] sm:$0xff] %v534
          %543 = vst [vmem:[%s282 + $0x18] sm:$0xff] %v535
          %544 = vst [vmem:[%s282 + $0x20] sm:$0xff] %v536
          %545 = vst [vmem:[%s282 + $0x28] sm:$0xff] %v537
          %546 = vst [vmem:[%s282 + $0x30] sm:$0xff] %v538
          %547 = vst [vmem:[%s282 + $0x38] sm:$0xff] %v539
        $region56: #{tpu_custom_call.1} parent=35 // pred_fallthru
          _
        %s548 = sand.u32 %s134, 1
        %s549 = scalar_lea.sflag [#allocation5], %s548
        %s550 = sand.u32 %s134, 1
        %s551 = smul.addr %s550, 64
        %s552 = scalar_lea.vmem [#allocation10], %s551
        // Predicated region
        $region57: #{tpu_custom_call.1} parent=35 // pred_check
          %p553 = pneg %p144
        $region58: #{tpu_custom_call.1} parent=35 // pred_check_branch
          %555 = sbr.rel (%p553) target = $region60
        $region59: #{tpu_custom_call.1} parent=35 // pred_region
          %s556 = smul.u32 8, %s27
          %s558 = ssub.s32 1024, 1024
          %559 = vsyncadd %s549, %s558
          %s560 = smul.addr %s556, 128
          %s561 = scalar_lea.hbm %s4, %s560
          %s562 = sshll.u32 %s552, 4
          %s563 = int_to_ptr.vmem [resolvable:$true] %s562
          %568 = dma.vmem_to_hbm [thread:$0]  %s563, 1024, %s561, %s549, 128, 128, 8
        $region60: #{tpu_custom_call.1} parent=35 // pred_fallthru
          _
      $region36: #{tpu_custom_call.1} parent=5 // pred_fallthru
        _
      %p569 = scmp.le.s32.totalorder 2, %s18
      // Predicated region
      $region61: #{tpu_custom_call.1} parent=5 // pred_check
        %p570 = pneg %p569
      $region62: #{tpu_custom_call.1} parent=5 // pred_check_branch
        %572 = sbr.rel (%p570) target = $region64
      $region63: #{tpu_custom_call.1} parent=5 // pred_region
        %s573 = ssub.s32 %s18, 2
        // Predicated region
        $region65: #{tpu_custom_call.1} parent=63 // pred_check
          %p574 = pneg %p150
        $region66: #{tpu_custom_call.1} parent=63 // pred_check_branch
          %576 = sbr.rel (%p574) target = $region68
        $region67: #{tpu_custom_call.1} parent=63 // pred_region
          %s577 = sand.u32 %s135, 1
          %s578 = scalar_lea.sflag [#allocation5], %s577
          %s579 = sand.u32 %s135, 1
          %s580 = smul.addr %s579, 64
          %s581 = scalar_lea.vmem [#allocation10], %s580
          %582 = dma.done %s578, 1024
        $region68: #{tpu_custom_call.1} parent=63 // pred_fallthru
          _
      $region64: #{tpu_custom_call.1} parent=5 // pred_fallthru
        _
    $region6: #{tpu_custom_call.1} parent=1 // loop_footer
      %s22 = sadd.s32 1, %s18
    $region7: #{tpu_custom_call.1} parent=1 // loop_footer_branch
      %17 = sbr.rel target = $region3
    $region8: #{tpu_custom_call.1} parent=1 // loop_exit
      _
    %583 = vsyncpa [#allocation4], 1
    %s584 = scalar_lea.sflag [#allocation4], 1
    %585 = vsyncpa %s584, 1
    %586 = vsyncpa [#allocation9], 1
    %587 = vsyncpa [#allocation5], 1
    %s588 = scalar_lea.sflag [#allocation5], 1
    %589 = vsyncpa %s588, 1
    %590 = vsyncpa [#allocation6], 1
    %s591 = scalar_lea.sflag [#allocation6], 1
    %592 = vsyncpa %s591, 1

// kernel: tpu_custom_call.1
$region0: #{tpu_custom_call.1}
  #allocation0 [shape = 'u32[]', space=smem, size = 0x4, offset = 0x4, fixed_abs, tag = 'smem constant byte address 0x4 - core index']
  #allocation1 [shape = 'u32[144,128]{1,0:T(1,128)}', space=vmem, size = 0x12000, scoped, tag = 'internal scratch']
  #allocation2 [shape = 'f32[64,128]{1,0:T(8,128)}', space=vmem, size = 0x8000, scoped, tag = 'scratch operand']
  #allocation11 [shape = 's32[]', space=sflag, size = 0x4, offset = 0, fixed_abs, tag = 'sflag constant byte address 0x0 - dummy sync flag']
  %s0 = inlined_call_operand.hbm [shape: f32[3], index: 0, kind: input, shape index: {}]
  %s1 = inlined_call_operand.hbm [shape: f32[3,128,128], index: 1, kind: input, shape index: {}]
  %s2 = inlined_call_operand.hbm [shape: f32[128,128], index: 2, kind: input, shape index: {}]
  %s3 = inlined_call_operand.vmem [shape: f32[1,128], index: 3, kind: input, shape index: {}]
  %s4 = inlined_call_operand.hbm [shape: f32[128,128], index: 4, kind: output, shape index: {}]
  %s5 = sld [smem:[#allocation0]]
  $region69: #{tpu_custom_call.1} parent=0
    _
  %s7 = ssub.s32 1, %s5
  %s8 = scalar_select 0, %s7, %s5
  $region1: #{tpu_custom_call.1} parent=0
    #allocation3 [shape = 'u8[512]{0}', space=smem, size = 0x200, scoped, tag = 'input window, operand 0, single buffered']
    #allocation4 [shape = 's32[2]{0}', space=sflag, size = 0x8, scoped, tag = 'scoped memory for tpu_custom_call.1']
    #allocation5 [shape = 's32[2]{0}', space=sflag, size = 0x8, scoped, tag = 'scoped memory for tpu_custom_call.1']
    #allocation6 [shape = 's32[2]{0}', space=sflag, size = 0x8, scoped, tag = 'scoped memory for tpu_custom_call.1']
    #allocation7 [shape = 'u8[196608]{0}', space=vmem, size = 0x30000, scoped, tag = 'input window, operand 1']
    #allocation8 [shape = 'u8[65536]{0}', space=vmem, size = 0x10000, scoped, tag = 'input window, operand 2, single buffered']
    #allocation9 [shape = 's32[1]{0}', space=sflag, size = 0x4, scoped, tag = 'scoped memory for tpu_custom_call.1']
    #allocation10 [shape = 'u8[65536]{0}', space=vmem, size = 0x10000, scoped, tag = 'output window, operand 0']
    %9 = vsyncpa [#allocation6], 0
    %10 = vsyncpa [#allocation4], 0
    %s11 = scalar_lea.sflag [#allocation4], 1
    %12 = vsyncpa %s11, 0
    %13 = vsyncpa [#allocation9], 0
    %14 = vsyncpa [#allocation5], 0
    %s15 = scalar_lea.sflag [#allocation5], 1
    %16 = vsyncpa %s15, 0
    loop: start=0, step=1, limit=4
    $region2: #{tpu_custom_call.1} parent=1 // loop_pre_header
      _
    $region3: #{tpu_custom_call.1} parent=1 // loop_header
      %s18 = sphi 0, %s22
      %p19 = scmp.ge.s32.totalorder %s18, 4
      %s25 = sphi 0, %s37
      %s26 = sphi 0, %s33
      %s27 = sphi 0, %s25
      %s28 = sphi 0, %s26
      %s29 = sphi 0, %s27
      %s30 = sphi 0, %s28
      %s38 = sphi 0, %s38
      %s40 = sphi 0, %s38
      %s41 = sphi 0, %s40
      %s55 = sphi 0, %s41
      %s63 = sphi 0, %s65
      %s66 = sphi 0, %s63
      %s67 = sphi 0, %s66
      %s83 = sphi 0, %s67
      %s87 = sphi 0, %s87
      %s89 = sphi 0, %s87
      %s90 = sphi 0, %s89
      %s104 = sphi 0, %s90
      %s108 = sphi 0, %s108
      %s110 = sphi 0, %s108
      %s111 = sphi 0, %s110
      %s125 = sphi 0, %s111
      %s131 = sphi 0, %s133
      %s134 = sphi 0, %s131
      %s135 = sphi 0, %s134
      %s151 = sphi 0, %s135
    $region4: #{tpu_custom_call.1} parent=1 // loop_header_branch
      %21 = sbr.rel (%p19) target = $region8
    $region5: #{tpu_custom_call.1} parent=1 // loop_body
      %s23 = ssub.s32 %s18, 1
      %s24 = ssub.s32 %s18, 2
      %s31 = sadd.s32 1, %s26
      %p32 = scmp.ge.s32.totalorder %s31, 1
      %s33 = scalar_select %p32, 0, %s31
      %s34 = sadd.s32 1, %s25
      %s35 = scalar_select %p32, %s34, %s25
      %p36 = scmp.ge.s32.totalorder %s35, 2
      %s37 = scalar_select %p36, 0, %s35
      %s39 = sadd.s32 %s38, 1
      %p42 = scmp.eq.s32.totalorder %s18, 1
      %p43 = scmp.ne.s32.totalorder %s38, %s40
      %p44 = scmp.eq.s32.totalorder %s18, 0
      %p45 = por %p43, %p44
      %p46 = scmp.ne.s32.totalorder %s38, %s40
      %p47 = scmp.eq.s32.totalorder %s23, 1
      %p48 = por %p46, %p47
      %p49 = scmp.ne.s32.totalorder %s40, %s41
      %p50 = scmp.eq.s32.totalorder %s23, 0
      %p51 = por %p49, %p50
      %p52 = scmp.ne.s32.totalorder %s40, %s41
      %p53 = scmp.eq.s32.totalorder %s24, 1
      %p54 = por %p52, %p53
      %p56 = scmp.ne.s32.totalorder %s41, %s55
      %p57 = scmp.eq.s32.totalorder %s24, 0
      %p58 = por %p56, %p57
      %s59 = ssub.s32 %s25, %s37
      %s60 = ssub.s32 %s26, %s33
      %s61 = sor.u32 %s59, %s60
      %p62 = scmp.eq.s32.totalorder %s61, 0
      %s64 = sadd.s32 %s63, 1
      %s65 = scalar_select %p62, %s63, %s64
      %p68 = pneg %p62
      %p69 = scmp.eq.s32.totalorder %s18, 1
      %p70 = por %p68, %p69
      %p71 = scmp.ne.s32.totalorder %s63, %s66
      %p72 = scmp.eq.s32.totalorder %s18, 0
      %p73 = por %p71, %p72
      %p74 = scmp.ne.s32.totalorder %s63, %s66
      %p75 = scmp.eq.s32.totalorder %s23, 1
      %p76 = por %p74, %p75
      %p77 = scmp.ne.s32.totalorder %s66, %s67
      %p78 = scmp.eq.s32.totalorder %s23, 0
      %p79 = por %p77, %p78
      %p80 = scmp.ne.s32.totalorder %s66, %s67
      %p81 = scmp.eq.s32.totalorder %s24, 1
      %p82 = por %p80, %p81
      %p84 = scmp.ne.s32.totalorder %s67, %s83
      %p85 = scmp.eq.s32.totalorder %s24, 0
      %p86 = por %p84, %p85
      %s88 = sadd.s32 %s87, 1
      %p91 = scmp.eq.s32.totalorder %s18, 1
      %p92 = scmp.ne.s32.totalorder %s87, %s89
      %p93 = scmp.eq.s32.totalorder %s18, 0
      %p94 = por %p92, %p93
      %p95 = scmp.ne.s32.totalorder %s87, %s89
      %p96 = scmp.eq.s32.totalorder %s23, 1
      %p97 = por %p95, %p96
      %p98 = scmp.ne.s32.totalorder %s89, %s90
      %p99 = scmp.eq.s32.totalorder %s23, 0
      %p100 = por %p98, %p99
      %p101 = scmp.ne.s32.totalorder %s89, %s90
      %p102 = scmp.eq.s32.totalorder %s24, 1
      %p103 = por %p101, %p102
      %p105 = scmp.ne.s32.totalorder %s90, %s104
      %p106 = scmp.eq.s32.totalorder %s24, 0
      %p107 = por %p105, %p106
      %s109 = sadd.s32 %s108, 1
      %p112 = scmp.eq.s32.totalorder %s18, 1
      %p113 = scmp.ne.s32.totalorder %s108, %s110
      %p114 = scmp.eq.s32.totalorder %s18, 0
      %p115 = por %p113, %p114
      %p116 = scmp.ne.s32.totalorder %s108, %s110
      %p117 = scmp.eq.s32.totalorder %s23, 1
      %p118 = por %p116, %p117
      %p119 = scmp.ne.s32.totalorder %s110, %s111
      %p120 = scmp.eq.s32.totalorder %s23, 0
      %p121 = por %p119, %p120
      %p122 = scmp.ne.s32.totalorder %s110, %s111
      %p123 = scmp.eq.s32.totalorder %s24, 1
      %p124 = por %p122, %p123
      %p126 = scmp.ne.s32.totalorder %s111, %s125
      %p127 = scmp.eq.s32.totalorder %s24, 0
      %p128 = por %p126, %p127
      %s129 = ssub.s32 %s25, %s37
      %p130 = scmp.eq.s32.totalorder %s129, 0
      %s132 = sadd.s32 %s131, 1
      %s133 = scalar_select %p130, %s131, %s132
      %p136 = pneg %p130
      %p137 = scmp.eq.s32.totalorder %s18, 1
      %p138 = por %p136, %p137
      %p139 = scmp.ne.s32.totalorder %s131, %s134
      %p140 = scmp.eq.s32.totalorder %s18, 0
      %p141 = por %p139, %p140
      %p142 = scmp.ne.s32.totalorder %s131, %s134
      %p143 = scmp.eq.s32.totalorder %s23, 1
      %p144 = por %p142, %p143
      %p145 = scmp.ne.s32.totalorder %s134, %s135
      %p146 = scmp.eq.s32.totalorder %s23, 0
      %p147 = por %p145, %p146
      %p148 = scmp.ne.s32.totalorder %s134, %s135
      %p149 = scmp.eq.s32.totalorder %s24, 1
      %p150 = por %p148, %p149
      %p152 = scmp.ne.s32.totalorder %s135, %s151
      %p153 = scmp.eq.s32.totalorder %s24, 0
      %p154 = por %p152, %p153
      %p155 = scmp.le.s32.totalorder 1, %s18
      %p156 = scmp.lt.s32.totalorder %s18, 3
      %p157 = pnand %p155, %p156
      %p158 = pneg %p157
      // Predicated region
      $region9: #{tpu_custom_call.1} parent=5 // pred_check
        _
      $region10: #{tpu_custom_call.1} parent=5 // pred_check_branch
        %160 = sbr.rel (%p157) target = $region12
      $region11: #{tpu_custom_call.1} parent=5 // pred_region
        %s161 = ssub.s32 %s18, 1
        // Predicated region
        $region13: #{tpu_custom_call.1} parent=11 // pred_check
          %p162 = pneg %p51
        $region14: #{tpu_custom_call.1} parent=11 // pred_check_branch
          %164 = sbr.rel (%p162) target = $region16
        $region15: #{tpu_custom_call.1} parent=11 // pred_region
          %s166 = ssub.s32 16, 16
          %167 = vsyncadd [#allocation6], %s166
          %170 = dma.hbm_to_smem %s0, 16, [#allocation3], [#allocation6]
        $region16: #{tpu_custom_call.1} parent=11 // pred_fallthru
          _
        // Predicated region
        $region17: #{tpu_custom_call.1} parent=11 // pred_check
          %p171 = pneg %p100
        $region18: #{tpu_custom_call.1} parent=11 // pred_check_branch
          %173 = sbr.rel (%p171) target = $region20
        $region19: #{tpu_custom_call.1} parent=11 // pred_region
          %s175 = ssub.s32 2048, 2048
          %176 = vsyncadd [#allocation9], %s175
          %s177 = sshll.u32 [#allocation8], 4
          %s178 = int_to_ptr.vmem [resolvable:$true] %s177
          %183 = dma.hbm_to_vmem [thread:$0]  %s2, 2048, %s178, [#allocation9], 128, 128, 8
        $region20: #{tpu_custom_call.1} parent=11 // pred_fallthru
          _
        // Predicated region
        $region21: #{tpu_custom_call.1} parent=11 // pred_check
          %p184 = pneg %p121
        $region22: #{tpu_custom_call.1} parent=11 // pred_check_branch
          %186 = sbr.rel (%p184) target = $region24
        $region23: #{tpu_custom_call.1} parent=11 // pred_region
          _
        $region24: #{tpu_custom_call.1} parent=11 // pred_fallthru
          _
      $region12: #{tpu_custom_call.1} parent=5 // pred_fallthru
        _
      %p187 = scmp.lt.s32.totalorder %s18, 2
      // Predicated region
      $region25: #{tpu_custom_call.1} parent=5 // pred_check
        %p188 = pneg %p187
      $region26: #{tpu_custom_call.1} parent=5 // pred_check_branch
        %190 = sbr.rel (%p188) target = $region28
      $region27: #{tpu_custom_call.1} parent=5 // pred_region
        // Predicated region
        $region29: #{tpu_custom_call.1} parent=27 // pred_check
          %p191 = pneg %p73
        $region30: #{tpu_custom_call.1} parent=27 // pred_check_branch
          %193 = sbr.rel (%p191) target = $region32
        $region31: #{tpu_custom_call.1} parent=27 // pred_region
          #allocation12 [shape = 'u32[6]{0}', space=smem, size = 0x18, scoped, tag = 'DMA stride descriptor']
          %s194 = sand.u32 %s63, 1
          %s195 = scalar_lea.sflag [#allocation4], %s194
          %s196 = sand.u32 %s63, 1
          %s197 = smul.addr %s196, 192
          %s198 = scalar_lea.vmem [#allocation7], %s197
          %s199 = smul.u32 8, %s25
          %s201 = ssub.s32 3072, 3072
          %202 = vsyncadd %s195, %s201
          %s203 = sadd.s32 %s26, %s199
          %s204 = smul.addr %s203, 128
          %s205 = scalar_lea.hbm %s1, %s204
          %s207 = sshll.u32 1, 14
          %s208 = sxor.u32 4294967295, %s207
          %s210 = sld [smem:[#allocation0]]
          %s211 = sadd.s32 2, %s210
          %s213 = sshll.u32 7, 26
          %s214 = sxor.u32 4294967295, %s213
          %s215 = sand.u32 0, %s214
          %s216 = sshll.u32 %s211, 26
          %s217 = sor.u32 %s215, %s216
          %s218 = sshll.u32 %s198, 4
          %s219 = int_to_ptr.vmem [resolvable:$true] %s218
          %225 = sst [smem:[#allocation12]] 2048
          %s226 = scalar_lea.smem [#allocation12], 1
          %227 = sst [smem:[%s226]] 1024
          %s228 = scalar_lea.smem [#allocation12], 2
          %229 = sst [smem:[%s228]] 8
          %s230 = scalar_lea.smem [#allocation12], 3
          %231 = sst [smem:[%s230]] 128
          %s232 = scalar_lea.smem [#allocation12], 4
          %233 = sst [smem:[%s232]] 128
          %s234 = scalar_lea.smem [#allocation12], 5
          %235 = sst [smem:[%s234]] 8
          %237 = dma.general %s205, 3072, %s219, %s195, [#allocation11], [#allocation12], %s217, 0
        $region32: #{tpu_custom_call.1} parent=27 // pred_fallthru
          _
      $region28: #{tpu_custom_call.1} parent=5 // pred_fallthru
        _
      %p238 = scmp.le.s32.totalorder 1, %s18
      %p239 = scmp.lt.s32.totalorder %s18, 3
      %p240 = pnand %p238, %p239
      %p241 = pneg %p240
      // Predicated region
      $region33: #{tpu_custom_call.1} parent=5 // pred_check
        _
      $region34: #{tpu_custom_call.1} parent=5 // pred_check_branch
        %243 = sbr.rel (%p240) target = $region36
      $region35: #{tpu_custom_call.1} parent=5 // pred_region
        %s244 = ssub.s32 %s18, 1
        // Predicated region
        $region37: #{tpu_custom_call.1} parent=35 // pred_check
          %p245 = pneg %p51
        $region38: #{tpu_custom_call.1} parent=35 // pred_check_branch
          %247 = sbr.rel (%p245) target = $region40
        $region39: #{tpu_custom_call.1} parent=35 // pred_region
          %248 = dma.done [#allocation6], 16
        $region40: #{tpu_custom_call.1} parent=35 // pred_fallthru
          _
        %s249 = sand.u32 %s66, 1
        %s250 = scalar_lea.sflag [#allocation4], %s249
        %s251 = sand.u32 %s66, 1
        %s252 = smul.addr %s251, 192
        %s253 = scalar_lea.vmem [#allocation7], %s252
        // Predicated region
        $region41: #{tpu_custom_call.1} parent=35 // pred_check
          %p254 = pneg %p79
        $region42: #{tpu_custom_call.1} parent=35 // pred_check_branch
          %256 = sbr.rel (%p254) target = $region44
        $region43: #{tpu_custom_call.1} parent=35 // pred_region
          %257 = dma.done %s250, 3072
        $region44: #{tpu_custom_call.1} parent=35 // pred_fallthru
          _
        // Predicated region
        $region45: #{tpu_custom_call.1} parent=35 // pred_check
          %p258 = pneg %p100
        $region46: #{tpu_custom_call.1} parent=35 // pred_check_branch
          %260 = sbr.rel (%p258) target = $region48
        $region47: #{tpu_custom_call.1} parent=35 // pred_region
          %261 = dma.done [#allocation9], 2048
        $region48: #{tpu_custom_call.1} parent=35 // pred_fallthru
          _
        %262 = sfence
        %p263 = pneg %p51
        %p264 = pneg %p48
        %s265 = sand.u32 %s66, 1
        %s266 = scalar_lea.sflag [#allocation4], %s265
        %s267 = sand.u32 %s66, 1
        %s268 = smul.addr %s267, 192
        %s269 = scalar_lea.vmem [#allocation7], %s268
        %p270 = pneg %p79
        %p271 = pneg %p76
        %p272 = pneg %p100
        %p273 = pneg %p97
        %p274 = pneg %p121
        %p275 = pneg %p118
        %p276 = pneg %p147
        %p277 = pneg %p144
        %s278 = sand.u32 %s134, 1
        %s279 = scalar_lea.sflag [#allocation5], %s278
        %s280 = sand.u32 %s134, 1
        %s281 = smul.addr %s280, 64
        %s282 = scalar_lea.vmem [#allocation10], %s281
        %s283 = smul.u32 8, %s27
        %s284 = smul.u32 8, %s27
        %p285 = scmp.eq.s32.totalorder %s28, 0
        // Predicated region
        $region49: #{tpu_custom_call.1} parent=35 // pred_check
          %p286 = pneg %p285
        $region50: #{tpu_custom_call.1} parent=35 // pred_check_branch
          %288 = sbr.rel (%p286) target = $region52
        $region51: #{tpu_custom_call.1} parent=35 // pred_region
          %289 = vst [vmem:[#allocation2] sm:$0xff] 0.0
          %290 = vst [vmem:[#allocation2 + $0x8] sm:$0xff] 0.0
          %291 = vst [vmem:[#allocation2 + $0x10] sm:$0xff] 0.0
          %292 = vst [vmem:[#allocation2 + $0x18] sm:$0xff] 0.0
          %293 = vst [vmem:[#allocation2 + $0x20] sm:$0xff] 0.0
          %294 = vst [vmem:[#allocation2 + $0x28] sm:$0xff] 0.0
          %295 = vst [vmem:[#allocation2 + $0x30] sm:$0xff] 0.0
          %296 = vst [vmem:[#allocation2 + $0x38] sm:$0xff] 0.0
        $region52: #{tpu_custom_call.1} parent=35 // pred_fallthru
          _
        %s297 = sld [smem:[#allocation3]]
        %v298 = vld [vmem:[%s253] sm:$0xff]
        %v299 = vld [vmem:[%s253 + $0x8] sm:$0xff]
        %v300 = vld [vmem:[%s253 + $0x10] sm:$0xff]
        %v301 = vld [vmem:[%s253 + $0x18] sm:$0xff]
        %v302 = vld [vmem:[%s253 + $0x20] sm:$0xff]
        %v303 = vld [vmem:[%s253 + $0x28] sm:$0xff]
        %v304 = vld [vmem:[%s253 + $0x30] sm:$0xff]
        %v305 = vld [vmem:[%s253 + $0x38] sm:$0xff]
        %v306 = vstv %s297
        %v307 = vmul.f32 %v306, %v298
        %v308 = vmul.f32 %v306, %v299
        %v309 = vmul.f32 %v306, %v300
        %v310 = vmul.f32 %v306, %v301
        %v311 = vmul.f32 %v306, %v302
        %v312 = vmul.f32 %v306, %v303
        %v313 = vmul.f32 %v306, %v304
        %v314 = vmul.f32 %v306, %v305
        %s315 = sld [smem:[#allocation3 + $0x1]]
        %s316 = scalar_lea.vmem %s253, 64 [#allocation7]
        %v317 = vld [vmem:[%s316] sm:$0xff]
        %v318 = vld [vmem:[%s316 + $0x8] sm:$0xff]
        %v319 = vld [vmem:[%s316 + $0x10] sm:$0xff]
        %v320 = vld [vmem:[%s316 + $0x18] sm:$0xff]
        %v321 = vld [vmem:[%s316 + $0x20] sm:$0xff]
        %v322 = vld [vmem:[%s316 + $0x28] sm:$0xff]
        %v323 = vld [vmem:[%s316 + $0x30] sm:$0xff]
        %v324 = vld [vmem:[%s316 + $0x38] sm:$0xff]
        %v325 = vstv %s315
        %v326 = vmul.f32 %v325, %v317
        %v327 = vmul.f32 %v325, %v318
        %v328 = vmul.f32 %v325, %v319
        %v329 = vmul.f32 %v325, %v320
        %v330 = vmul.f32 %v325, %v321
        %v331 = vmul.f32 %v325, %v322
        %v332 = vmul.f32 %v325, %v323
        %v333 = vmul.f32 %v325, %v324
        %v334 = vadd.f32 %v307, %v326
        %v335 = vadd.f32 %v308, %v327
        %v336 = vadd.f32 %v309, %v328
        %v337 = vadd.f32 %v310, %v329
        %v338 = vadd.f32 %v311, %v330
        %v339 = vadd.f32 %v312, %v331
        %v340 = vadd.f32 %v313, %v332
        %v341 = vadd.f32 %v314, %v333
        %s342 = sld [smem:[#allocation3 + $0x2]]
        %s343 = scalar_lea.vmem %s253, 128 [#allocation7]
        %v344 = vld [vmem:[%s343] sm:$0xff]
        %v345 = vld [vmem:[%s343 + $0x8] sm:$0xff]
        %v346 = vld [vmem:[%s343 + $0x10] sm:$0xff]
        %v347 = vld [vmem:[%s343 + $0x18] sm:$0xff]
        %v348 = vld [vmem:[%s343 + $0x20] sm:$0xff]
        %v349 = vld [vmem:[%s343 + $0x28] sm:$0xff]
        %v350 = vld [vmem:[%s343 + $0x30] sm:$0xff]
        %v351 = vld [vmem:[%s343 + $0x38] sm:$0xff]
        %v352 = vstv %s342
        %v353 = vmul.f32 %v352, %v344
        %v354 = vmul.f32 %v352, %v345
        %v355 = vmul.f32 %v352, %v346
        %v356 = vmul.f32 %v352, %v347
        %v357 = vmul.f32 %v352, %v348
        %v358 = vmul.f32 %v352, %v349
        %v359 = vmul.f32 %v352, %v350
        %v360 = vmul.f32 %v352, %v351
        %v361 = vadd.f32 %v334, %v353
        %v362 = vadd.f32 %v335, %v354
        %v363 = vadd.f32 %v336, %v355
        %v364 = vadd.f32 %v337, %v356
        %v365 = vadd.f32 %v338, %v357
        %v366 = vadd.f32 %v339, %v358
        %v367 = vadd.f32 %v340, %v359
        %v368 = vadd.f32 %v341, %v360
        %v369 = vld [vmem:[#allocation8] sm:$0xff]
        %v370 = vld [vmem:[#allocation8 + $0x8] sm:$0xff]
        %v371 = vld [vmem:[#allocation8 + $0x10] sm:$0xff]
        %v372 = vld [vmem:[#allocation8 + $0x18] sm:$0xff]
        %v373 = vld [vmem:[#allocation8 + $0x20] sm:$0xff]
        %v374 = vld [vmem:[#allocation8 + $0x28] sm:$0xff]
        %v375 = vld [vmem:[#allocation8 + $0x30] sm:$0xff]
        %v376 = vld [vmem:[#allocation8 + $0x38] sm:$0xff]
        %v377 = vld [vmem:[#allocation8 + $0x40] sm:$0xff]
        %v378 = vld [vmem:[#allocation8 + $0x48] sm:$0xff]
        %v379 = vld [vmem:[#allocation8 + $0x50] sm:$0xff]
        %v380 = vld [vmem:[#allocation8 + $0x58] sm:$0xff]
        %v381 = vld [vmem:[#allocation8 + $0x60] sm:$0xff]
        %v382 = vld [vmem:[#allocation8 + $0x68] sm:$0xff]
        %v383 = vld [vmem:[#allocation8 + $0x70] sm:$0xff]
        %v384 = vld [vmem:[#allocation8 + $0x78] sm:$0xff]
        %v385 = vld [vmem:[#allocation2] sm:$0xff]
        %v386 = vld [vmem:[#allocation2 + $0x8] sm:$0xff]
        %v387 = vld [vmem:[#allocation2 + $0x10] sm:$0xff]
        %v388 = vld [vmem:[#allocation2 + $0x18] sm:$0xff]
        %v389 = vld [vmem:[#allocation2 + $0x20] sm:$0xff]
        %v390 = vld [vmem:[#allocation2 + $0x28] sm:$0xff]
        %v391 = vld [vmem:[#allocation2 + $0x30] sm:$0xff]
        %v392 = vld [vmem:[#allocation2 + $0x38] sm:$0xff]
        %393 = vmatprep.subr.mxu0 0.0
        %394 = vmatpush1.msra.mxu0 %v369
        %395 = vmatprep.subr.mxu0 0.0
        %396 = vmatpush1.msra.mxu0 %v370
        %397 = vmatprep.subr.mxu0 0.0
        %398 = vmatpush1.msra.mxu0 %v371
        %399 = vmatprep.subr.mxu0 0.0
        %400 = vmatpush1.msra.mxu0 %v372
        %401 = vmatprep.subr.mxu0 0.0
        %402 = vmatpush1.msra.mxu0 %v373
        %403 = vmatprep.subr.mxu0 0.0
        %404 = vmatpush1.msra.mxu0 %v374
        %405 = vmatprep.subr.mxu0 0.0
        %406 = vmatpush1.msra.mxu0 %v375
        %407 = vmatprep.subr.mxu0 0.0
        %408 = vmatpush1.msra.mxu0 %v376
        %409 = vmatprep.subr.mxu0 0.0
        %410 = vmatpush1.msra.mxu0 %v377
        %411 = vmatprep.subr.mxu0 0.0
        %412 = vmatpush1.msra.mxu0 %v378
        %413 = vmatprep.subr.mxu0 0.0
        %414 = vmatpush1.msra.mxu0 %v379
        %415 = vmatprep.subr.mxu0 0.0
        %416 = vmatpush1.msra.mxu0 %v380
        %417 = vmatprep.subr.mxu0 0.0
        %418 = vmatpush1.msra.mxu0 %v381
        %419 = vmatprep.subr.mxu0 0.0
        %420 = vmatpush1.msra.mxu0 %v382
        %421 = vmatprep.subr.mxu0 0.0
        %422 = vmatpush1.msra.mxu0 %v383
        %423 = vmatprep.subr.mxu0 0.0
        %424 = vmatpush1.msra.mxu0 %v384
        %425 = vmatprep.subr.mxu0 0.0
        %426 = vmatpush1.msra.mxu0 0.0
        %427 = vmatprep.subr.mxu0 0.0
        %428 = vmatpush1.msra.mxu0 0.0
        %429 = vmatprep.subr.mxu0 0.0
        %430 = vmatpush1.msra.mxu0 0.0
        %431 = vmatprep.subr.mxu0 0.0
        %432 = vmatpush1.msra.mxu0 0.0
        %433 = vmatprep.subr.mxu0 0.0
        %434 = vmatpush1.msra.mxu0 0.0
        %435 = vmatprep.subr.mxu0 0.0
        %436 = vmatpush1.msra.mxu0 0.0
        %437 = vmatprep.subr.mxu0 0.0
        %438 = vmatpush1.msra.mxu0 0.0
        %439 = vmatprep.subr.mxu0 0.0
        %440 = vmatpush1.msra.mxu0 0.0
        %441 = vmatprep.subr.mxu0 0.0
        %442 = vmatpush1.msra.mxu0 0.0
        %443 = vmatprep.subr.mxu0 0.0
        %444 = vmatpush1.msra.mxu0 0.0
        %445 = vmatprep.subr.mxu0 0.0
        %446 = vmatpush1.msra.mxu0 0.0
        %447 = vmatprep.subr.mxu0 0.0
        %448 = vmatpush1.msra.mxu0 0.0
        %449 = vmatprep.subr.mxu0 0.0
        %450 = vmatpush1.msra.mxu0 0.0
        %451 = vmatprep.subr.mxu0 0.0
        %452 = vmatpush1.msra.mxu0 0.0
        %453 = vmatprep.subr.mxu0 0.0
        %454 = vmatpush1.msra.mxu0 0.0
        %455 = vmatprep.subr.mxu0 0.0
        %456 = vmatpush1.msra.mxu0 0.0
        %457 = vmatprep.mubr.f32.mxu0 0.0
        %458 = vmatmul.mubr.f32.gmra.mrb[0].mxu0 %v361
        %v459 = vpop.f32.mrb[0].mxu0
        %v460 = vadd.f32 0.0, %v459
        %v461 = vpop.f32.mrb[0].mxu0
        %462 = vmatprep.mubr.f32.mxu0 0.0
        %463 = vmatmul.mubr.f32.gmra.mrb[0].mxu0 %v362
        %v464 = vpop.f32.mrb[0].mxu0
        %v465 = vadd.f32 0.0, %v464
        %v466 = vpop.f32.mrb[0].mxu0
        %467 = vmatprep.mubr.f32.mxu0 0.0
        %468 = vmatmul.mubr.f32.gmra.mrb[0].mxu0 %v363
        %v469 = vpop.f32.mrb[0].mxu0
        %v470 = vadd.f32 0.0, %v469
        %v471 = vpop.f32.mrb[0].mxu0
        %472 = vmatprep.mubr.f32.mxu0 0.0
        %473 = vmatmul.mubr.f32.gmra.mrb[0].mxu0 %v364
        %v474 = vpop.f32.mrb[0].mxu0
        %v475 = vadd.f32 0.0, %v474
        %v476 = vpop.f32.mrb[0].mxu0
        %477 = vmatprep.mubr.f32.mxu0 0.0
        %478 = vmatmul.mubr.f32.gmra.mrb[0].mxu0 %v365
        %v479 = vpop.f32.mrb[0].mxu0
        %v480 = vadd.f32 0.0, %v479
        %v481 = vpop.f32.mrb[0].mxu0
        %482 = vmatprep.mubr.f32.mxu0 0.0
        %483 = vmatmul.mubr.f32.gmra.mrb[0].mxu0 %v366
        %v484 = vpop.f32.mrb[0].mxu0
        %v485 = vadd.f32 0.0, %v484
        %v486 = vpop.f32.mrb[0].mxu0
        %487 = vmatprep.mubr.f32.mxu0 0.0
        %488 = vmatmul.mubr.f32.gmra.mrb[0].mxu0 %v367
        %v489 = vpop.f32.mrb[0].mxu0
        %v490 = vadd.f32 0.0, %v489
        %v491 = vpop.f32.mrb[0].mxu0
        %492 = vmatprep.mubr.f32.mxu0 0.0
        %493 = vmatmul.mubr.f32.gmra.mrb[0].mxu0 %v368
        %v494 = vpop.f32.mrb[0].mxu0
        %v495 = vadd.f32 0.0, %v494
        %v496 = vpop.f32.mrb[0].mxu0
        %497 = vdwg.mxu0
        %v498 = vadd.f32 %v385, %v460
        %v499 = vadd.f32 %v386, %v465
        %v500 = vadd.f32 %v387, %v470
        %v501 = vadd.f32 %v388, %v475
        %v502 = vadd.f32 %v389, %v480
        %v503 = vadd.f32 %v390, %v485
        %v504 = vadd.f32 %v391, %v490
        %v505 = vadd.f32 %v392, %v495
        %506 = vst [vmem:[#allocation2] sm:$0xff] %v498
        %507 = vst [vmem:[#allocation2 + $0x8] sm:$0xff] %v499
        %508 = vst [vmem:[#allocation2 + $0x10] sm:$0xff] %v500
        %509 = vst [vmem:[#allocation2 + $0x18] sm:$0xff] %v501
        %510 = vst [vmem:[#allocation2 + $0x20] sm:$0xff] %v502
        %511 = vst [vmem:[#allocation2 + $0x28] sm:$0xff] %v503
        %512 = vst [vmem:[#allocation2 + $0x30] sm:$0xff] %v504
        %513 = vst [vmem:[#allocation2 + $0x38] sm:$0xff] %v505
        // Predicated region
        $region53: #{tpu_custom_call.1} parent=35 // pred_check
          %p514 = pneg %p285
        $region54: #{tpu_custom_call.1} parent=35 // pred_check_branch
          %516 = sbr.rel (%p514) target = $region56
        $region55: #{tpu_custom_call.1} parent=35 // pred_region
          %v517 = vld [vmem:[#allocation2] sm:$0xff]
          %v518 = vld [vmem:[#allocation2 + $0x8] sm:$0xff]
          %v519 = vld [vmem:[#allocation2 + $0x10] sm:$0xff]
          %v520 = vld [vmem:[#allocation2 + $0x18] sm:$0xff]
          %v521 = vld [vmem:[#allocation2 + $0x20] sm:$0xff]
          %v522 = vld [vmem:[#allocation2 + $0x28] sm:$0xff]
          %v523 = vld [vmem:[#allocation2 + $0x30] sm:$0xff]
          %v524 = vld [vmem:[#allocation2 + $0x38] sm:$0xff]
          %v525 = vld [vmem:[%s3] sm:$0x1]
          %v527 = vlaneseq
          %v528 = vshrl.u32 %v527, 7
          %v529 = vsub.s32 0, %v528
          %v530 = vrot.slane %v525, %v529
          %v532 = vadd.f32 %v517, %v530
          %v533 = vadd.f32 %v518, %v530
          %v534 = vadd.f32 %v519, %v530
          %v535 = vadd.f32 %v520, %v530
          %v536 = vadd.f32 %v521, %v530
          %v537 = vadd.f32 %v522, %v530
          %v538 = vadd.f32 %v523, %v530
          %v539 = vadd.f32 %v524, %v530
          %540 = vst [vmem:[%s282] sm:$0xff] %v532
          %541 = vst [vmem:[%s282 + $0x8] sm:$0xff] %v533
          %542 = vst [vmem:[%s282 + $0x10] sm:$0xff] %v534
          %543 = vst [vmem:[%s282 + $0x18] sm:$0xff] %v535
          %544 = vst [vmem:[%s282 + $0x20] sm:$0xff] %v536
          %545 = vst [vmem:[%s282 + $0x28] sm:$0xff] %v537
          %546 = vst [vmem:[%s282 + $0x30] sm:$0xff] %v538
          %547 = vst [vmem:[%s282 + $0x38] sm:$0xff] %v539
        $region56: #{tpu_custom_call.1} parent=35 // pred_fallthru
          _
        %s548 = sand.u32 %s134, 1
        %s549 = scalar_lea.sflag [#allocation5], %s548
        %s550 = sand.u32 %s134, 1
        %s551 = smul.addr %s550, 64
        %s552 = scalar_lea.vmem [#allocation10], %s551
        // Predicated region
        $region57: #{tpu_custom_call.1} parent=35 // pred_check
          %p553 = pneg %p144
        $region58: #{tpu_custom_call.1} parent=35 // pred_check_branch
          %555 = sbr.rel (%p553) target = $region60
        $region59: #{tpu_custom_call.1} parent=35 // pred_region
          %s556 = smul.u32 8, %s27
          %s558 = ssub.s32 1024, 1024
          %559 = vsyncadd %s549, %s558
          %s560 = smul.addr %s556, 128
          %s561 = scalar_lea.hbm %s4, %s560
          %s562 = sshll.u32 %s552, 4
          %s563 = int_to_ptr.vmem [resolvable:$true] %s562
          %568 = dma.vmem_to_hbm [thread:$0]  %s563, 1024, %s561, %s549, 128, 128, 8
        $region60: #{tpu_custom_call.1} parent=35 // pred_fallthru
          _
      $region36: #{tpu_custom_call.1} parent=5 // pred_fallthru
        _
      %p569 = scmp.le.s32.totalorder 2, %s18
      // Predicated region
      $region61: #{tpu_custom_call.1} parent=5 // pred_check
        %p570 = pneg %p569
      $region62: #{tpu_custom_call.1} parent=5 // pred_check_branch
        %572 = sbr.rel (%p570) target = $region64
      $region63: #{tpu_custom_call.1} parent=5 // pred_region
        %s573 = ssub.s32 %s18, 2
        // Predicated region
        $region65: #{tpu_custom_call.1} parent=63 // pred_check
          %p574 = pneg %p150
        $region66: #{tpu_custom_call.1} parent=63 // pred_check_branch
          %576 = sbr.rel (%p574) target = $region68
        $region67: #{tpu_custom_call.1} parent=63 // pred_region
          %s577 = sand.u32 %s135, 1
          %s578 = scalar_lea.sflag [#allocation5], %s577
          %s579 = sand.u32 %s135, 1
          %s580 = smul.addr %s579, 64
          %s581 = scalar_lea.vmem [#allocation10], %s580
          %582 = dma.done %s578, 1024
        $region68: #{tpu_custom_call.1} parent=63 // pred_fallthru
          _
      $region64: #{tpu_custom_call.1} parent=5 // pred_fallthru
        _
    $region6: #{tpu_custom_call.1} parent=1 // loop_footer
      %s22 = sadd.s32 1, %s18
    $region7: #{tpu_custom_call.1} parent=1 // loop_footer_branch
      %17 = sbr.rel target = $region3
    $region8: #{tpu_custom_call.1} parent=1 // loop_exit
      _
    %583 = vsyncpa [#allocation4], 1
    %s584 = scalar_lea.sflag [#allocation4], 1
    %585 = vsyncpa %s584, 1
    %586 = vsyncpa [#allocation9], 1
    %587 = vsyncpa [#allocation5], 1
    %s588 = scalar_lea.sflag [#allocation5], 1
    %589 = vsyncpa %s588, 1
    %590 = vsyncpa [#allocation6], 1
    %s591 = scalar_lea.sflag [#allocation6], 1
    %592 = vsyncpa %s591, 1

</llo_original>
